<compile_context>
chip_gen: v5e
topology: v5e:2x2
jax: 0.10.0
libtpu: 0.0.40
codegen_flags: <defaults>
</compile_context>

<pallas_src>
import functools

import jax
import jax.numpy as jnp
from jax.experimental import pallas as pl
from jax.experimental.pallas import tpu as pltpu

_LIPSWISH_SCALE = 0.909
_LANE = 128


def _round_up(v, m):
    return ((v + m - 1) // m) * m


def _mlp_kernel(num_linear, *refs):
    """refs = (x_ref, w0, b0, w1, b1, ..., w_{L-1}, b_{L-1}, out_ref).

    One batch tile per grid step. Weights/biases stay VMEM-resident (constant
    index_map). MXU operands are bf16 with f32 accumulation; bias add and
    activations run in f32. The 0.909 LipSwish scale has been folded into the
    *next* layer's weights by the wrapper, so hidden activations are
    silu(x) = x * sigmoid(x).
    """
    x_ref = refs[0]
    out_ref = refs[-1]
    params = refs[1:-1]

    h = x_ref[...]                                       # bf16 (TB, in_p)
    for i in range(num_linear):
        w = params[2 * i][...]                           # bf16 (K_p, N_p)
        b = params[2 * i + 1][...]                       # f32  (1,  N_p)
        acc = jnp.dot(h, w, preferred_element_type=jnp.float32) + b
        if i < num_linear - 1:
            acc = acc * jax.nn.sigmoid(acc)              # silu (0.909 folded into next W)
            h = acc.astype(jnp.bfloat16)                 # next MXU operand
        else:
            out_ref[...] = jax.nn.sigmoid(acc).astype(out_ref.dtype)


def discriminator_mlp_forward(x, params, *, block_batch=128):
    """x: (batch, in_size) f32. params: flat list [w0, b0, w1, b1, ...] with
    w_i (in_features, out_features) and b_i (1, out_features). Returns
    (batch, out_size) f32."""
    num_linear = len(params) // 2
    batch, in_size = x.shape
    out_size = params[-2].shape[1]

    # ---- fold LipSwish scale, zero-pad feature dims to 128 lanes, cast to bf16
    padded_params = []
    for i in range(num_linear):
        w = params[2 * i].astype(jnp.float32)
        b = jnp.reshape(params[2 * i + 1], (1, -1)).astype(jnp.float32)
        if i > 0:
            # this layer consumes a LipSwish output -> fold 0.909 on input side
            w = w * _LIPSWISH_SCALE
        k, n = w.shape
        kp, np_ = _round_up(k, _LANE), _round_up(n, _LANE)
        wp = jnp.zeros((kp, np_), jnp.float32).at[:k, :n].set(w)
        bp = jnp.zeros((1, np_), jnp.float32).at[:, :n].set(b)
        padded_params.append(wp.astype(jnp.bfloat16))    # bf16 MXU operand
        padded_params.append(bp)                         # f32 bias
    in_p = padded_params[0].shape[0]
    out_p = padded_params[-2].shape[1]

    # ---- pad batch to the tile size, pad+cast the activation input
    tb = block_batch
    batch_p = _round_up(max(batch, tb), tb)
    x_p = jnp.zeros((batch_p, in_p), jnp.float32).at[:batch, :in_size].set(x)
    x_p = x_p.astype(jnp.bfloat16)

    grid = (batch_p // tb,)

    # ---- block specs: batch-tiled activations, resident weights/biases
    x_spec = pl.BlockSpec((tb, in_p), lambda i: (i, 0))
    param_specs = [pl.BlockSpec(p.shape, lambda i: (0, 0)) for p in padded_params]
    out_spec = pl.BlockSpec((tb, out_p), lambda i: (i, 0))

    # ---- explicit VMEM budget (inputs/outputs are double-buffered)
    def nbytes(a):
        return a.size * a.dtype.itemsize

    max_width = max(p.shape[1] for p in padded_params[::2])
    footprint = (2 * sum(nbytes(p) for p in padded_params)   # resident params (x2 buf)
                 + 2 * tb * in_p * 2                          # x tiles, bf16
                 + 2 * tb * out_p * 4                         # out tiles, f32
                 + 6 * tb * max_width * 4)                    # f32 intermediates headroom
    vmem_limit = int(min(max(2 * footprint, 16 * 1024 * 1024), 48 * 1024 * 1024))

    kernel = functools.partial(_mlp_kernel, num_linear)

    out_padded = pl.pallas_call(
        kernel,
        out_shape=jax.ShapeDtypeStruct((batch_p, out_p), jnp.float32),
        grid_spec=pltpu.PrefetchScalarGridSpec(
            num_scalar_prefetch=0,
            grid=grid,
            in_specs=[x_spec] + param_specs,
            out_specs=out_spec,
        ),
        compiler_params=pltpu.CompilerParams(
            dimension_semantics=("parallel",),
            vmem_limit_bytes=vmem_limit,
        ),
    )(x_p, *padded_params)

    # strip batch padding and the lane padding (padded logits are 0 -> sigmoid 0.5)
    return out_padded[:batch, :out_size]


def init_discriminator_mlp_params(key, gen_state_size, data_state_size,
                                  mlp_size, num_layers, time_features=1):
    """Deterministic synthetic parameters matching the module's layer shapes."""
    in_size = time_features + gen_state_size
    out_size = gen_state_size * (time_features + data_state_size)

    # Layer sizes: in -> mlp -> (mlp)*(num_layers-1) -> out
    sizes = [in_size] + [mlp_size] * num_layers + [out_size]

    params = []
    for i in range(len(sizes) - 1):
        fan_in, fan_out = sizes[i], sizes[i + 1]
        key, wk, bk = jax.random.split(key, 3)
        bound = 1.0 / jnp.sqrt(jnp.float32(fan_in))
        w = jax.random.uniform(wk, (fan_in, fan_out), jnp.float32, -bound, bound)
        b = jax.random.uniform(bk, (1, fan_out), jnp.float32, -bound, bound)
        params.append(w)
        params.append(b)
    return params, in_size, out_size


def reference_forward(x, params):
    """Pure-JAX f32 reference with the original (unfolded, unpadded) params."""
    num_linear = len(params) // 2
    h = x
    for i in range(num_linear):
        h = h @ params[2 * i] + jnp.reshape(params[2 * i + 1], (1, -1))
        if i < num_linear - 1:
            h = _LIPSWISH_SCALE * h * jax.nn.sigmoid(h)
        else:
            h = jax.nn.sigmoid(h)
    return h


if __name__ == "__main__":
    # Small, forward-consistent shapes.
    gen_state_size = 4
    data_state_size = 3
    time_features = 1
    mlp_size = 32
    num_layers = 2
    batch = 256          # 2 grid steps at TB=128 (exercises the batch pipeline)

    key = jax.random.PRNGKey(0)
    pkey, xkey = jax.random.split(key)

    params, in_size, out_size = init_discriminator_mlp_params(
        pkey, gen_state_size, data_state_size, mlp_size, num_layers, time_features)

    x = jax.random.normal(xkey, (batch, in_size), jnp.float32)

    out = discriminator_mlp_forward(x, params)
    out = jax.block_until_ready(out)

    ref = reference_forward(x, params)
    assert out.shape == (batch, out_size), out.shape
    max_err = float(jnp.max(jnp.abs(out - ref)))
    # bf16 MXU operands with f32 accumulation; sigmoid output -> small abs error.
    assert max_err < 2e-2, f"mismatch vs reference: max abs err {max_err}"

    print("KERNEL_OK")
</pallas_src>

<mosaic_0001>
module attributes {stable_mosaic.version = 11 : i64} {
  func.func @_mlp_kernel(%arg0: i32, %arg1: memref<128x128xbf16, #tpu.memory_space<vmem>>, %arg2: memref<128x128xbf16, #tpu.memory_space<vmem>>, %arg3: memref<1x128xf32, #tpu.memory_space<vmem>>, %arg4: memref<128x128xbf16, #tpu.memory_space<vmem>>, %arg5: memref<1x128xf32, #tpu.memory_space<vmem>>, %arg6: memref<128x128xbf16, #tpu.memory_space<vmem>>, %arg7: memref<1x128xf32, #tpu.memory_space<vmem>>, %arg8: memref<128x128xf32, #tpu.memory_space<vmem>>) attributes {dimension_semantics = [#tpu.dimension_semantics<parallel>], iteration_bounds = array<i64: 2>, scalar_prefetch = 0 : i64, scratch_operands = 0 : i64, tpu.core_type = #tpu.core_type<tc>, window_params = [{transform_indices = @transform_0, window_bounds = array<i64: 128, 128>}, {pipeline_mode = #tpu.pipeline_mode<synchronous>, transform_indices = @transform_1, window_bounds = array<i64: 128, 128>}, {pipeline_mode = #tpu.pipeline_mode<synchronous>, transform_indices = @transform_2, window_bounds = array<i64: 1, 128>}, {pipeline_mode = #tpu.pipeline_mode<synchronous>, transform_indices = @transform_3, window_bounds = array<i64: 128, 128>}, {pipeline_mode = #tpu.pipeline_mode<synchronous>, transform_indices = @transform_4, window_bounds = array<i64: 1, 128>}, {pipeline_mode = #tpu.pipeline_mode<synchronous>, transform_indices = @transform_5, window_bounds = array<i64: 128, 128>}, {pipeline_mode = #tpu.pipeline_mode<synchronous>, transform_indices = @transform_6, window_bounds = array<i64: 1, 128>}, {transform_indices = @transform_7, window_bounds = array<i64: 128, 128>}]} {
    %c0 = arith.constant 0 : index
    %c0_0 = arith.constant 0 : index
    %0 = vector.load %arg1[%c0, %c0_0] : memref<128x128xbf16, #tpu.memory_space<vmem>>, vector<128x128xbf16>
    %c0_1 = arith.constant 0 : index
    %c0_2 = arith.constant 0 : index
    %1 = vector.load %arg2[%c0_1, %c0_2] : memref<128x128xbf16, #tpu.memory_space<vmem>>, vector<128x128xbf16>
    %c0_3 = arith.constant 0 : index
    %c0_4 = arith.constant 0 : index
    %2 = vector.load %arg3[%c0_3, %c0_4] : memref<1x128xf32, #tpu.memory_space<vmem>>, vector<1x128xf32>
    %cst = arith.constant dense<0.000000e+00> : vector<128x128xf32>
    %3 = tpu.matmul %0, %1, %cst {dimension_numbers = #tpu.dot_dimension_numbers<[1], [0], [0], [1], [0, 0, 1, 1], [], []>} : vector<128x128xbf16>, vector<128x128xbf16>, vector<128x128xf32> -> vector<128x128xf32>
    %4 = vector.broadcast %2 : vector<1x128xf32> to vector<128x128xf32>
    %5 = arith.addf %3, %4 : vector<128x128xf32>
    %6 = arith.negf %5 : vector<128x128xf32>
    %7 = math.exp %6 : vector<128x128xf32>
    %cst_5 = arith.constant 1.000000e+00 : f32
    %8 = vector.broadcast %cst_5 : f32 to vector<128x128xf32>
    %9 = arith.addf %8, %7 : vector<128x128xf32>
    %10 = arith.divf %8, %9 : vector<128x128xf32>
    %11 = arith.mulf %5, %10 : vector<128x128xf32>
    %12 = arith.truncf %11 : vector<128x128xf32> to vector<128x128xbf16>
    %c0_6 = arith.constant 0 : index
    %c0_7 = arith.constant 0 : index
    %13 = vector.load %arg4[%c0_6, %c0_7] : memref<128x128xbf16, #tpu.memory_space<vmem>>, vector<128x128xbf16>
    %c0_8 = arith.constant 0 : index
    %c0_9 = arith.constant 0 : index
    %14 = vector.load %arg5[%c0_8, %c0_9] : memref<1x128xf32, #tpu.memory_space<vmem>>, vector<1x128xf32>
    %cst_10 = arith.constant dense<0.000000e+00> : vector<128x128xf32>
    %15 = tpu.matmul %12, %13, %cst_10 {dimension_numbers = #tpu.dot_dimension_numbers<[1], [0], [0], [1], [0, 0, 1, 1], [], []>} : vector<128x128xbf16>, vector<128x128xbf16>, vector<128x128xf32> -> vector<128x128xf32>
    %16 = vector.broadcast %14 : vector<1x128xf32> to vector<128x128xf32>
    %17 = arith.addf %15, %16 : vector<128x128xf32>
    %18 = arith.negf %17 : vector<128x128xf32>
    %19 = math.exp %18 : vector<128x128xf32>
    %cst_11 = arith.constant 1.000000e+00 : f32
    %20 = vector.broadcast %cst_11 : f32 to vector<128x128xf32>
    %21 = arith.addf %20, %19 : vector<128x128xf32>
    %22 = arith.divf %20, %21 : vector<128x128xf32>
    %23 = arith.mulf %17, %22 : vector<128x128xf32>
    %24 = arith.truncf %23 : vector<128x128xf32> to vector<128x128xbf16>
    %c0_12 = arith.constant 0 : index
    %c0_13 = arith.constant 0 : index
    %25 = vector.load %arg6[%c0_12, %c0_13] : memref<128x128xbf16, #tpu.memory_space<vmem>>, vector<128x128xbf16>
    %c0_14 = arith.constant 0 : index
    %c0_15 = arith.constant 0 : index
    %26 = vector.load %arg7[%c0_14, %c0_15] : memref<1x128xf32, #tpu.memory_space<vmem>>, vector<1x128xf32>
    %cst_16 = arith.constant dense<0.000000e+00> : vector<128x128xf32>
    %27 = tpu.matmul %24, %25, %cst_16 {dimension_numbers = #tpu.dot_dimension_numbers<[1], [0], [0], [1], [0, 0, 1, 1], [], []>} : vector<128x128xbf16>, vector<128x128xbf16>, vector<128x128xf32> -> vector<128x128xf32>
    %28 = vector.broadcast %26 : vector<1x128xf32> to vector<128x128xf32>
    %29 = arith.addf %27, %28 : vector<128x128xf32>
    %30 = arith.negf %29 : vector<128x128xf32>
    %31 = math.exp %30 : vector<128x128xf32>
    %cst_17 = arith.constant 1.000000e+00 : f32
    %32 = vector.broadcast %cst_17 : f32 to vector<128x128xf32>
    %33 = arith.addf %32, %31 : vector<128x128xf32>
    %34 = arith.divf %32, %33 : vector<128x128xf32>
    %c0_18 = arith.constant 0 : index
    %c0_19 = arith.constant 0 : index
    %35 = vector.load %arg8[%c0_18, %c0_19] : memref<128x128xf32, #tpu.memory_space<vmem>>, vector<128x128xf32>
    tpu.vector_store %arg8[%c0_18, %c0_19], %34 {strides = array<i32>} : memref<128x128xf32, #tpu.memory_space<vmem>>, vector<128x128xf32>,
    return
  }
  func.func @transform_0(%arg0: i32) -> (i32, i32) {
    %c0_i32 = arith.constant 0 : i32
    %c0_i32_0 = arith.constant 0 : i32
    return %arg0, %c0_i32 : i32, i32
  }
  func.func @transform_1(%arg0: i32) -> (i32, i32) {
    %c0_i32 = arith.constant 0 : i32
    %c0_i32_0 = arith.constant 0 : i32
    %c0_i32_1 = arith.constant 0 : i32
    return %c0_i32, %c0_i32_0 : i32, i32
  }
  func.func @transform_2(%arg0: i32) -> (i32, i32) {
    %c0_i32 = arith.constant 0 : i32
    %c0_i32_0 = arith.constant 0 : i32
    %c0_i32_1 = arith.constant 0 : i32
    return %c0_i32, %c0_i32_0 : i32, i32
  }
  func.func @transform_3(%arg0: i32) -> (i32, i32) {
    %c0_i32 = arith.constant 0 : i32
    %c0_i32_0 = arith.constant 0 : i32
    %c0_i32_1 = arith.constant 0 : i32
    return %c0_i32, %c0_i32_0 : i32, i32
  }
  func.func @transform_4(%arg0: i32) -> (i32, i32) {
    %c0_i32 = arith.constant 0 : i32
    %c0_i32_0 = arith.constant 0 : i32
    %c0_i32_1 = arith.constant 0 : i32
    return %c0_i32, %c0_i32_0 : i32, i32
  }
  func.func @transform_5(%arg0: i32) -> (i32, i32) {
    %c0_i32 = arith.constant 0 : i32
    %c0_i32_0 = arith.constant 0 : i32
    %c0_i32_1 = arith.constant 0 : i32
    return %c0_i32, %c0_i32_0 : i32, i32
  }
  func.func @transform_6(%arg0: i32) -> (i32, i32) {
    %c0_i32 = arith.constant 0 : i32
    %c0_i32_0 = arith.constant 0 : i32
    %c0_i32_1 = arith.constant 0 : i32
    return %c0_i32, %c0_i32_0 : i32, i32
  }
  func.func @transform_7(%arg0: i32) -> (i32, i32) {
    %c0_i32 = arith.constant 0 : i32
    %c0_i32_0 = arith.constant 0 : i32
    return %arg0, %c0_i32 : i32, i32
  }
}

</mosaic_0001>

<llo_original>
// kernel: tpu_custom_call.1
$region0: #{tpu_custom_call.1}
  #allocation0 [shape = 'u32[]', space=smem, size = 0x4, offset = 0x4, fixed_abs, tag = 'smem constant byte address 0x4 - core index']
  #allocation1 [shape = 'u32[72,128]{1,0:T(1,128)}', space=vmem, size = 0x9000, scoped, tag = 'internal scratch']
  %s0 = inlined_call_operand.hbm [shape: bf16[256,128], index: 0, kind: input, shape index: {}]
  %s1 = inlined_call_operand.hbm [shape: bf16[128,128], index: 1, kind: input, shape index: {}]
  %s2 = inlined_call_operand.vmem [shape: f32[1,128], index: 2, kind: input, shape index: {}]
  %s3 = inlined_call_operand.hbm [shape: bf16[128,128], index: 3, kind: input, shape index: {}]
  %s4 = inlined_call_operand.vmem [shape: f32[1,128], index: 4, kind: input, shape index: {}]
  %s5 = inlined_call_operand.hbm [shape: bf16[128,128], index: 5, kind: input, shape index: {}]
  %s6 = inlined_call_operand.vmem [shape: f32[1,128], index: 6, kind: input, shape index: {}]
  %s7 = inlined_call_operand.hbm [shape: f32[256,128], index: 7, kind: output, shape index: {}]
  %s8 = sld [smem:[#allocation0]]
  $region77: #{tpu_custom_call.1} parent=0
    _
  %s10 = ssub.s32 1, %s8
  %s11 = scalar_select 0, %s10, %s8
  $region1: #{tpu_custom_call.1} parent=0
    #allocation2 [shape = 'u8[65536]{0}', space=vmem, size = 0x10000, scoped, tag = 'input window, operand 0']
    #allocation3 [shape = 's32[2]{0}', space=sflag, size = 0x8, scoped, tag = 'scoped memory for tpu_custom_call.1']
    #allocation4 [shape = 's32[2]{0}', space=sflag, size = 0x8, scoped, tag = 'scoped memory for tpu_custom_call.1']
    #allocation5 [shape = 'u8[32768]{0}', space=vmem, size = 0x8000, scoped, tag = 'input window, operand 1, single buffered']
    #allocation6 [shape = 's32[1]{0}', space=sflag, size = 0x4, scoped, tag = 'scoped memory for tpu_custom_call.1']
    #allocation7 [shape = 'u8[32768]{0}', space=vmem, size = 0x8000, scoped, tag = 'input window, operand 3, single buffered']
    #allocation8 [shape = 'u8[32768]{0}', space=vmem, size = 0x8000, scoped, tag = 'input window, operand 5, single buffered']
    #allocation9 [shape = 's32[1]{0}', space=sflag, size = 0x4, scoped, tag = 'scoped memory for tpu_custom_call.1']
    #allocation10 [shape = 'u8[131072]{0}', space=vmem, size = 0x20000, scoped, tag = 'output window, operand 0']
    %12 = vsyncpa [#allocation3], 0
    %s13 = scalar_lea.sflag [#allocation3], 1
    %14 = vsyncpa %s13, 0
    %15 = vsyncpa [#allocation6], 0
    %16 = vsyncpa [#allocation9], 0
    %17 = vsyncpa [#allocation4], 0
    %s18 = scalar_lea.sflag [#allocation4], 1
    %19 = vsyncpa %s18, 0
    loop: start=0, step=1, limit=4
    $region2: #{tpu_custom_call.1} parent=1 // loop_pre_header
      _
    $region3: #{tpu_custom_call.1} parent=1 // loop_header
      %s21 = sphi 0, %s25
      %p22 = scmp.ge.s32.totalorder %s21, 4
      %s31 = sphi 0, %s33
      %s34 = sphi 0, %s31
      %s35 = sphi 0, %s34
      %s51 = sphi 0, %s35
      %s55 = sphi 0, %s55
      %s57 = sphi 0, %s55
      %s58 = sphi 0, %s57
      %s72 = sphi 0, %s58
      %s76 = sphi 0, %s76
      %s78 = sphi 0, %s76
      %s79 = sphi 0, %s78
      %s93 = sphi 0, %s79
      %s97 = sphi 0, %s97
      %s99 = sphi 0, %s97
      %s100 = sphi 0, %s99
      %s114 = sphi 0, %s100
      %s118 = sphi 0, %s118
      %s120 = sphi 0, %s118
      %s121 = sphi 0, %s120
      %s135 = sphi 0, %s121
      %s139 = sphi 0, %s139
      %s141 = sphi 0, %s139
      %s142 = sphi 0, %s141
      %s156 = sphi 0, %s142
      %s160 = sphi 0, %s160
      %s162 = sphi 0, %s160
      %s163 = sphi 0, %s162
      %s177 = sphi 0, %s163
      %s183 = sphi 0, %s185
      %s186 = sphi 0, %s183
      %s187 = sphi 0, %s186
      %s203 = sphi 0, %s187
    $region4: #{tpu_custom_call.1} parent=1 // loop_header_branch
      %24 = sbr.rel (%p22) target = $region8
    $region5: #{tpu_custom_call.1} parent=1 // loop_body
      %s26 = ssub.s32 %s21, 1
      %s27 = ssub.s32 %s21, 2
      %s28 = sadd.s32 %s21, 1
      %s29 = ssub.s32 %s21, %s28
      %p30 = scmp.eq.s32.totalorder %s29, 0
      %s32 = sadd.s32 %s31, 1
      %s33 = scalar_select %p30, %s31, %s32
      %p36 = pneg %p30
      %p37 = scmp.eq.s32.totalorder %s21, 1
      %p38 = por %p36, %p37
      %p39 = scmp.ne.s32.totalorder %s31, %s34
      %p40 = scmp.eq.s32.totalorder %s21, 0
      %p41 = por %p39, %p40
      %p42 = scmp.ne.s32.totalorder %s31, %s34
      %p43 = scmp.eq.s32.totalorder %s26, 1
      %p44 = por %p42, %p43
      %p45 = scmp.ne.s32.totalorder %s34, %s35
      %p46 = scmp.eq.s32.totalorder %s26, 0
      %p47 = por %p45, %p46
      %p48 = scmp.ne.s32.totalorder %s34, %s35
      %p49 = scmp.eq.s32.totalorder %s27, 1
      %p50 = por %p48, %p49
      %p52 = scmp.ne.s32.totalorder %s35, %s51
      %p53 = scmp.eq.s32.totalorder %s27, 0
      %p54 = por %p52, %p53
      %s56 = sadd.s32 %s55, 1
      %p59 = scmp.eq.s32.totalorder %s21, 1
      %p60 = scmp.ne.s32.totalorder %s55, %s57
      %p61 = scmp.eq.s32.totalorder %s21, 0
      %p62 = por %p60, %p61
      %p63 = scmp.ne.s32.totalorder %s55, %s57
      %p64 = scmp.eq.s32.totalorder %s26, 1
      %p65 = por %p63, %p64
      %p66 = scmp.ne.s32.totalorder %s57, %s58
      %p67 = scmp.eq.s32.totalorder %s26, 0
      %p68 = por %p66, %p67
      %p69 = scmp.ne.s32.totalorder %s57, %s58
      %p70 = scmp.eq.s32.totalorder %s27, 1
      %p71 = por %p69, %p70
      %p73 = scmp.ne.s32.totalorder %s58, %s72
      %p74 = scmp.eq.s32.totalorder %s27, 0
      %p75 = por %p73, %p74
      %s77 = sadd.s32 %s76, 1
      %p80 = scmp.eq.s32.totalorder %s21, 1
      %p81 = scmp.ne.s32.totalorder %s76, %s78
      %p82 = scmp.eq.s32.totalorder %s21, 0
      %p83 = por %p81, %p82
      %p84 = scmp.ne.s32.totalorder %s76, %s78
      %p85 = scmp.eq.s32.totalorder %s26, 1
      %p86 = por %p84, %p85
      %p87 = scmp.ne.s32.totalorder %s78, %s79
      %p88 = scmp.eq.s32.totalorder %s26, 0
      %p89 = por %p87, %p88
      %p90 = scmp.ne.s32.totalorder %s78, %s79
      %p91 = scmp.eq.s32.totalorder %s27, 1
      %p92 = por %p90, %p91
      %p94 = scmp.ne.s32.totalorder %s79, %s93
      %p95 = scmp.eq.s32.totalorder %s27, 0
      %p96 = por %p94, %p95
      %s98 = sadd.s32 %s97, 1
      %p101 = scmp.eq.s32.totalorder %s21, 1
      %p102 = scmp.ne.s32.totalorder %s97, %s99
      %p103 = scmp.eq.s32.totalorder %s21, 0
      %p104 = por %p102, %p103
      %p105 = scmp.ne.s32.totalorder %s97, %s99
      %p106 = scmp.eq.s32.totalorder %s26, 1
      %p107 = por %p105, %p106
      %p108 = scmp.ne.s32.totalorder %s99, %s100
      %p109 = scmp.eq.s32.totalorder %s26, 0
      %p110 = por %p108, %p109
      %p111 = scmp.ne.s32.totalorder %s99, %s100
      %p112 = scmp.eq.s32.totalorder %s27, 1
      %p113 = por %p111, %p112
      %p115 = scmp.ne.s32.totalorder %s100, %s114
      %p116 = scmp.eq.s32.totalorder %s27, 0
      %p117 = por %p115, %p116
      %s119 = sadd.s32 %s118, 1
      %p122 = scmp.eq.s32.totalorder %s21, 1
      %p123 = scmp.ne.s32.totalorder %s118, %s120
      %p124 = scmp.eq.s32.totalorder %s21, 0
      %p125 = por %p123, %p124
      %p126 = scmp.ne.s32.totalorder %s118, %s120
      %p127 = scmp.eq.s32.totalorder %s26, 1
      %p128 = por %p126, %p127
      %p129 = scmp.ne.s32.totalorder %s120, %s121
      %p130 = scmp.eq.s32.totalorder %s26, 0
      %p131 = por %p129, %p130
      %p132 = scmp.ne.s32.totalorder %s120, %s121
      %p133 = scmp.eq.s32.totalorder %s27, 1
      %p134 = por %p132, %p133
      %p136 = scmp.ne.s32.totalorder %s121, %s135
      %p137 = scmp.eq.s32.totalorder %s27, 0
      %p138 = por %p136, %p137
      %s140 = sadd.s32 %s139, 1
      %p143 = scmp.eq.s32.totalorder %s21, 1
      %p144 = scmp.ne.s32.totalorder %s139, %s141
      %p145 = scmp.eq.s32.totalorder %s21, 0
      %p146 = por %p144, %p145
      %p147 = scmp.ne.s32.totalorder %s139, %s141
      %p148 = scmp.eq.s32.totalorder %s26, 1
      %p149 = por %p147, %p148
      %p150 = scmp.ne.s32.totalorder %s141, %s142
      %p151 = scmp.eq.s32.totalorder %s26, 0
      %p152 = por %p150, %p151
      %p153 = scmp.ne.s32.totalorder %s141, %s142
      %p154 = scmp.eq.s32.totalorder %s27, 1
      %p155 = por %p153, %p154
      %p157 = scmp.ne.s32.totalorder %s142, %s156
      %p158 = scmp.eq.s32.totalorder %s27, 0
      %p159 = por %p157, %p158
      %s161 = sadd.s32 %s160, 1
      %p164 = scmp.eq.s32.totalorder %s21, 1
      %p165 = scmp.ne.s32.totalorder %s160, %s162
      %p166 = scmp.eq.s32.totalorder %s21, 0
      %p167 = por %p165, %p166
      %p168 = scmp.ne.s32.totalorder %s160, %s162
      %p169 = scmp.eq.s32.totalorder %s26, 1
      %p170 = por %p168, %p169
      %p171 = scmp.ne.s32.totalorder %s162, %s163
      %p172 = scmp.eq.s32.totalorder %s26, 0
      %p173 = por %p171, %p172
      %p174 = scmp.ne.s32.totalorder %s162, %s163
      %p175 = scmp.eq.s32.totalorder %s27, 1
      %p176 = por %p174, %p175
      %p178 = scmp.ne.s32.totalorder %s163, %s177
      %p179 = scmp.eq.s32.totalorder %s27, 0
      %p180 = por %p178, %p179
      %s181 = ssub.s32 %s21, %s28
      %p182 = scmp.eq.s32.totalorder %s181, 0
      %s184 = sadd.s32 %s183, 1
      %s185 = scalar_select %p182, %s183, %s184
      %p188 = pneg %p182
      %p189 = scmp.eq.s32.totalorder %s21, 1
      %p190 = por %p188, %p189
      %p191 = scmp.ne.s32.totalorder %s183, %s186
      %p192 = scmp.eq.s32.totalorder %s21, 0
      %p193 = por %p191, %p192
      %p194 = scmp.ne.s32.totalorder %s183, %s186
      %p195 = scmp.eq.s32.totalorder %s26, 1
      %p196 = por %p194, %p195
      %p197 = scmp.ne.s32.totalorder %s186, %s187
      %p198 = scmp.eq.s32.totalorder %s26, 0
      %p199 = por %p197, %p198
      %p200 = scmp.ne.s32.totalorder %s186, %s187
      %p201 = scmp.eq.s32.totalorder %s27, 1
      %p202 = por %p200, %p201
      %p204 = scmp.ne.s32.totalorder %s187, %s203
      %p205 = scmp.eq.s32.totalorder %s27, 0
      %p206 = por %p204, %p205
      %p207 = scmp.le.s32.totalorder 1, %s21
      %p208 = scmp.lt.s32.totalorder %s21, 3
      %p209 = pnand %p207, %p208
      %p210 = pneg %p209
      // Predicated region
      $region9: #{tpu_custom_call.1} parent=5 // pred_check
        _
      $region10: #{tpu_custom_call.1} parent=5 // pred_check_branch
        %212 = sbr.rel (%p209) target = $region12
      $region11: #{tpu_custom_call.1} parent=5 // pred_region
        %s213 = ssub.s32 %s21, 1
        // Predicated region
        $region13: #{tpu_custom_call.1} parent=11 // pred_check
          %p214 = pneg %p68
        $region14: #{tpu_custom_call.1} parent=11 // pred_check_branch
          %216 = sbr.rel (%p214) target = $region16
        $region15: #{tpu_custom_call.1} parent=11 // pred_region
          %218 = vsyncadd [#allocation6], 0
          %s219 = sshll.u32 %s1, 4
          %s220 = int_to_ptr.hbm [resolvable:$true] %s219
          %s221 = sshll.u32 [#allocation5], 4
          %s222 = int_to_ptr.vmem [resolvable:$true] %s221
          %227 = dma.hbm_to_vmem [thread:$0]  %s220, 1024, %s222, [#allocation6], 64, 64, 4
        $region16: #{tpu_custom_call.1} parent=11 // pred_fallthru
          _
        // Predicated region
        $region17: #{tpu_custom_call.1} parent=11 // pred_check
          %p228 = pneg %p89
        $region18: #{tpu_custom_call.1} parent=11 // pred_check_branch
          %230 = sbr.rel (%p228) target = $region20
        $region19: #{tpu_custom_call.1} parent=11 // pred_region
          _
        $region20: #{tpu_custom_call.1} parent=11 // pred_fallthru
          _
        // Predicated region
        $region21: #{tpu_custom_call.1} parent=11 // pred_check
          %p231 = pneg %p110
        $region22: #{tpu_custom_call.1} parent=11 // pred_check_branch
          %233 = sbr.rel (%p231) target = $region24
        $region23: #{tpu_custom_call.1} parent=11 // pred_region
          %235 = vsyncadd [#allocation6], 0
          %s236 = sshll.u32 %s3, 4
          %s237 = int_to_ptr.hbm [resolvable:$true] %s236
          %s238 = sshll.u32 [#allocation7], 4
          %s239 = int_to_ptr.vmem [resolvable:$true] %s238
          %244 = dma.hbm_to_vmem [thread:$0]  %s237, 1024, %s239, [#allocation6], 64, 64, 4
        $region24: #{tpu_custom_call.1} parent=11 // pred_fallthru
          _
        // Predicated region
        $region25: #{tpu_custom_call.1} parent=11 // pred_check
          %p245 = pneg %p131
        $region26: #{tpu_custom_call.1} parent=11 // pred_check_branch
          %247 = sbr.rel (%p245) target = $region28
        $region27: #{tpu_custom_call.1} parent=11 // pred_region
          _
        $region28: #{tpu_custom_call.1} parent=11 // pred_fallthru
          _
        // Predicated region
        $region29: #{tpu_custom_call.1} parent=11 // pred_check
          %p248 = pneg %p152
        $region30: #{tpu_custom_call.1} parent=11 // pred_check_branch
          %250 = sbr.rel (%p248) target = $region32
        $region31: #{tpu_custom_call.1} parent=11 // pred_region
          %252 = vsyncadd [#allocation9], 0
          %s253 = sshll.u32 %s5, 4
          %s254 = int_to_ptr.hbm [resolvable:$true] %s253
          %s255 = sshll.u32 [#allocation8], 4
          %s256 = int_to_ptr.vmem [resolvable:$true] %s255
          %261 = dma.hbm_to_vmem [thread:$0]  %s254, 1024, %s256, [#allocation9], 64, 64, 4
        $region32: #{tpu_custom_call.1} parent=11 // pred_fallthru
          _
        // Predicated region
        $region33: #{tpu_custom_call.1} parent=11 // pred_check
          %p262 = pneg %p173
        $region34: #{tpu_custom_call.1} parent=11 // pred_check_branch
          %264 = sbr.rel (%p262) target = $region36
        $region35: #{tpu_custom_call.1} parent=11 // pred_region
          _
        $region36: #{tpu_custom_call.1} parent=11 // pred_fallthru
          _
      $region12: #{tpu_custom_call.1} parent=5 // pred_fallthru
        _
      %p265 = scmp.lt.s32.totalorder %s21, 2
      // Predicated region
      $region37: #{tpu_custom_call.1} parent=5 // pred_check
        %p266 = pneg %p265
      $region38: #{tpu_custom_call.1} parent=5 // pred_check_branch
        %268 = sbr.rel (%p266) target = $region40
      $region39: #{tpu_custom_call.1} parent=5 // pred_region
        // Predicated region
        $region41: #{tpu_custom_call.1} parent=39 // pred_check
          %p269 = pneg %p41
        $region42: #{tpu_custom_call.1} parent=39 // pred_check_branch
          %271 = sbr.rel (%p269) target = $region44
        $region43: #{tpu_custom_call.1} parent=39 // pred_region
          %s272 = sand.u32 %s31, 1
          %s273 = scalar_lea.sflag [#allocation3], %s272
          %s274 = sand.u32 %s31, 1
          %s275 = smul.addr %s274, 64
          %s276 = scalar_lea.vmem [#allocation2], %s275
          %s277 = smul.u32 16, %s21
          %279 = vsyncadd %s273, 0
          %s280 = smul.addr %s277, 4
          %s281 = scalar_lea.hbm %s0, %s280
          %s282 = sshll.u32 %s281, 4
          %s283 = int_to_ptr.hbm [resolvable:$true] %s282
          %s284 = sshll.u32 %s276, 4
          %s285 = int_to_ptr.vmem [resolvable:$true] %s284
          %290 = dma.hbm_to_vmem [thread:$0]  %s283, 1024, %s285, %s273, 64, 64, 4
        $region44: #{tpu_custom_call.1} parent=39 // pred_fallthru
          _
      $region40: #{tpu_custom_call.1} parent=5 // pred_fallthru
        _
      %p291 = scmp.le.s32.totalorder 1, %s21
      %p292 = scmp.lt.s32.totalorder %s21, 3
      %p293 = pnand %p291, %p292
      %p294 = pneg %p293
      // Predicated region
      $region45: #{tpu_custom_call.1} parent=5 // pred_check
        _
      $region46: #{tpu_custom_call.1} parent=5 // pred_check_branch
        %296 = sbr.rel (%p293) target = $region48
      $region47: #{tpu_custom_call.1} parent=5 // pred_region
        %s297 = ssub.s32 %s21, 1
        %s298 = sand.u32 %s34, 1
        %s299 = scalar_lea.sflag [#allocation3], %s298
        %s300 = sand.u32 %s34, 1
        %s301 = smul.addr %s300, 64
        %s302 = scalar_lea.vmem [#allocation2], %s301
        // Predicated region
        $region49: #{tpu_custom_call.1} parent=47 // pred_check
          %p303 = pneg %p47
        $region50: #{tpu_custom_call.1} parent=47 // pred_check_branch
          %305 = sbr.rel (%p303) target = $region52
        $region51: #{tpu_custom_call.1} parent=47 // pred_region
          %307 = dma.done %s299, 1024
        $region52: #{tpu_custom_call.1} parent=47 // pred_fallthru
          _
        // Predicated region
        $region53: #{tpu_custom_call.1} parent=47 // pred_check
          %p308 = pneg %p68
        $region54: #{tpu_custom_call.1} parent=47 // pred_check_branch
          %310 = sbr.rel (%p308) target = $region56
        $region55: #{tpu_custom_call.1} parent=47 // pred_region
          %312 = dma.done [#allocation6], 1024
        $region56: #{tpu_custom_call.1} parent=47 // pred_fallthru
          _
        // Predicated region
        $region57: #{tpu_custom_call.1} parent=47 // pred_check
          %p313 = pneg %p110
        $region58: #{tpu_custom_call.1} parent=47 // pred_check_branch
          %315 = sbr.rel (%p313) target = $region60
        $region59: #{tpu_custom_call.1} parent=47 // pred_region
          %317 = dma.done [#allocation6], 1024
        $region60: #{tpu_custom_call.1} parent=47 // pred_fallthru
          _
        // Predicated region
        $region61: #{tpu_custom_call.1} parent=47 // pred_check
          %p318 = pneg %p152
        $region62: #{tpu_custom_call.1} parent=47 // pred_check_branch
          %320 = sbr.rel (%p318) target = $region64
        $region63: #{tpu_custom_call.1} parent=47 // pred_region
          %322 = dma.done [#allocation9], 1024
        $region64: #{tpu_custom_call.1} parent=47 // pred_fallthru
          _
        %s323 = sand.u32 %s34, 1
        %s324 = scalar_lea.sflag [#allocation3], %s323
        %s325 = sand.u32 %s34, 1
        %s326 = smul.addr %s325, 64
        %s327 = scalar_lea.vmem [#allocation2], %s326
        %p328 = pneg %p47
        %p329 = pneg %p44
        %p330 = pneg %p68
        %p331 = pneg %p65
        %p332 = pneg %p89
        %p333 = pneg %p86
        %p334 = pneg %p110
        %p335 = pneg %p107
        %p336 = pneg %p131
        %p337 = pneg %p128
        %p338 = pneg %p152
        %p339 = pneg %p149
        %p340 = pneg %p173
        %p341 = pneg %p170
        %p342 = pneg %p199
        %p343 = pneg %p196
        %s344 = sand.u32 %s186, 1
        %s345 = scalar_lea.sflag [#allocation4], %s344
        %s346 = sand.u32 %s186, 1
        %s347 = smul.addr %s346, 128
        %s348 = scalar_lea.vmem [#allocation10], %s347
        %s349 = smul.u32 16, %s26
        %s350 = smul.u32 16, %s26
        %v351 = vld [vmem:[%s302] sm:$0xf]
        %v352 = vld [vmem:[%s302 + $0x4] sm:$0xf]
        %v353 = vld [vmem:[%s302 + $0x8] sm:$0xf]
        %v354 = vld [vmem:[%s302 + $0xc] sm:$0xf]
        %v355 = vld [vmem:[%s302 + $0x10] sm:$0xf]
        %v356 = vld [vmem:[%s302 + $0x14] sm:$0xf]
        %v357 = vld [vmem:[%s302 + $0x18] sm:$0xf]
        %v358 = vld [vmem:[%s302 + $0x1c] sm:$0xf]
        %v359 = vld [vmem:[%s302 + $0x20] sm:$0xf]
        %v360 = vld [vmem:[%s302 + $0x24] sm:$0xf]
        %v361 = vld [vmem:[%s302 + $0x28] sm:$0xf]
        %v362 = vld [vmem:[%s302 + $0x2c] sm:$0xf]
        %v363 = vld [vmem:[%s302 + $0x30] sm:$0xf]
        %v364 = vld [vmem:[%s302 + $0x34] sm:$0xf]
        %v365 = vld [vmem:[%s302 + $0x38] sm:$0xf]
        %v366 = vld [vmem:[%s302 + $0x3c] sm:$0xf]
        %v367 = vld [vmem:[#allocation5] sm:$0xf]
        %v368 = vld [vmem:[#allocation5 + $0x4] sm:$0xf]
        %v369 = vld [vmem:[#allocation5 + $0x8] sm:$0xf]
        %v370 = vld [vmem:[#allocation5 + $0xc] sm:$0xf]
        %v371 = vld [vmem:[#allocation5 + $0x10] sm:$0xf]
        %v372 = vld [vmem:[#allocation5 + $0x14] sm:$0xf]
        %v373 = vld [vmem:[#allocation5 + $0x18] sm:$0xf]
        %v374 = vld [vmem:[#allocation5 + $0x1c] sm:$0xf]
        %v375 = vld [vmem:[#allocation5 + $0x20] sm:$0xf]
        %v376 = vld [vmem:[#allocation5 + $0x24] sm:$0xf]
        %v377 = vld [vmem:[#allocation5 + $0x28] sm:$0xf]
        %v378 = vld [vmem:[#allocation5 + $0x2c] sm:$0xf]
        %v379 = vld [vmem:[#allocation5 + $0x30] sm:$0xf]
        %v380 = vld [vmem:[#allocation5 + $0x34] sm:$0xf]
        %v381 = vld [vmem:[#allocation5 + $0x38] sm:$0xf]
        %v382 = vld [vmem:[#allocation5 + $0x3c] sm:$0xf]
        %v383 = vld [vmem:[%s2] sm:$0x1]
        %v385 = vperm.slane %v383, 0
        %v403 = vunpack.c.l.b16 %v351
        %v404 = vunpack.c.l.b16 %v352
        %v405 = vunpack.c.l.b16 %v353
        %v406 = vunpack.c.l.b16 %v354
        %v407 = vunpack.c.l.b16 %v355
        %v408 = vunpack.c.l.b16 %v356
        %v409 = vunpack.c.l.b16 %v357
        %v410 = vunpack.c.l.b16 %v358
        %v411 = vunpack.c.l.b16 %v359
        %v412 = vunpack.c.l.b16 %v360
        %v413 = vunpack.c.l.b16 %v361
        %v414 = vunpack.c.l.b16 %v362
        %v415 = vunpack.c.l.b16 %v363
        %v416 = vunpack.c.l.b16 %v364
        %v417 = vunpack.c.l.b16 %v365
        %v418 = vunpack.c.l.b16 %v366
        %v419 = vpack.c.b16 %v404, %v403
        %v420 = vpack.c.b16 %v406, %v405
        %v421 = vpack.c.b16 %v408, %v407
        %v422 = vpack.c.b16 %v410, %v409
        %v423 = vpack.c.b16 %v412, %v411
        %v424 = vpack.c.b16 %v414, %v413
        %v425 = vpack.c.b16 %v416, %v415
        %v426 = vpack.c.b16 %v418, %v417
        %v451 = vunpack.c.l.b16 %v367
        %v452 = vunpack.c.l.b16 %v368
        %v453 = vunpack.c.l.b16 %v369
        %v454 = vunpack.c.l.b16 %v370
        %v455 = vunpack.c.l.b16 %v371
        %v456 = vunpack.c.l.b16 %v372
        %v457 = vunpack.c.l.b16 %v373
        %v458 = vunpack.c.l.b16 %v374
        %v459 = vunpack.c.l.b16 %v375
        %v460 = vunpack.c.l.b16 %v376
        %v461 = vunpack.c.l.b16 %v377
        %v462 = vunpack.c.l.b16 %v378
        %v463 = vunpack.c.l.b16 %v379
        %v464 = vunpack.c.l.b16 %v380
        %v465 = vunpack.c.l.b16 %v381
        %v466 = vunpack.c.l.b16 %v382
        %v467 = vpack.c.b16 %v452, %v451
        %v468 = vpack.c.b16 %v454, %v453
        %v469 = vpack.c.b16 %v456, %v455
        %v470 = vpack.c.b16 %v458, %v457
        %v471 = vpack.c.b16 %v460, %v459
        %v472 = vpack.c.b16 %v462, %v461
        %v473 = vpack.c.b16 %v464, %v463
        %v474 = vpack.c.b16 %v466, %v465
        %483 = vmatpush.bf16.msra.mxu0 %v474
        %484 = vmatpush.bf16.msra.mxu0 %v473
        %485 = vmatpush.bf16.msra.mxu0 %v472
        %486 = vmatpush.bf16.msra.mxu0 %v471
        %487 = vmatpush.bf16.msra.mxu0 %v470
        %488 = vmatpush.bf16.msra.mxu0 %v469
        %489 = vmatpush.bf16.msra.mxu0 %v468
        %490 = vmatpush.bf16.msra.mxu0 %v467
        %491 = vmatmul.bf16.gmra.mxu0 %v419
        %v492 = vpop.f32.mrf.mxu0
        %v493 = vadd.f32 %v385, %v492
        %v494 = vpop.f32.mrf.mxu0
        %v495 = vadd.f32 %v385, %v494
        %496 = vmatmul.bf16.gmra.mxu0 %v420
        %v497 = vpop.f32.mrf.mxu0
        %v498 = vadd.f32 %v385, %v497
        %v499 = vpop.f32.mrf.mxu0
        %v500 = vadd.f32 %v385, %v499
        %501 = vmatmul.bf16.gmra.mxu0 %v421
        %v502 = vpop.f32.mrf.mxu0
        %v503 = vadd.f32 %v385, %v502
        %v504 = vpop.f32.mrf.mxu0
        %v505 = vadd.f32 %v385, %v504
        %506 = vmatmul.bf16.gmra.mxu0 %v422
        %v507 = vpop.f32.mrf.mxu0
        %v508 = vadd.f32 %v385, %v507
        %v509 = vpop.f32.mrf.mxu0
        %v510 = vadd.f32 %v385, %v509
        %511 = vmatmul.bf16.gmra.mxu0 %v423
        %v512 = vpop.f32.mrf.mxu0
        %v513 = vadd.f32 %v385, %v512
        %v514 = vpop.f32.mrf.mxu0
        %v515 = vadd.f32 %v385, %v514
        %516 = vmatmul.bf16.gmra.mxu0 %v424
        %v517 = vpop.f32.mrf.mxu0
        %v518 = vadd.f32 %v385, %v517
        %v519 = vpop.f32.mrf.mxu0
        %v520 = vadd.f32 %v385, %v519
        %521 = vmatmul.bf16.gmra.mxu0 %v425
        %v522 = vpop.f32.mrf.mxu0
        %v523 = vadd.f32 %v385, %v522
        %v524 = vpop.f32.mrf.mxu0
        %v525 = vadd.f32 %v385, %v524
        %526 = vmatmul.bf16.gmra.mxu0 %v426
        %v527 = vpop.f32.mrf.mxu0
        %v528 = vadd.f32 %v385, %v527
        %v529 = vpop.f32.mrf.mxu0
        %v530 = vadd.f32 %v385, %v529
        %531 = vdwg.mxu0
        %v532 = vxor.u32 %v493, 2147483648
        %v533 = vxor.u32 %v495, 2147483648
        %v534 = vxor.u32 %v498, 2147483648
        %v535 = vxor.u32 %v500, 2147483648
        %v536 = vxor.u32 %v503, 2147483648
        %v537 = vxor.u32 %v505, 2147483648
        %v538 = vxor.u32 %v508, 2147483648
        %v539 = vxor.u32 %v510, 2147483648
        %v540 = vxor.u32 %v513, 2147483648
        %v541 = vxor.u32 %v515, 2147483648
        %v542 = vxor.u32 %v518, 2147483648
        %v543 = vxor.u32 %v520, 2147483648
        %v544 = vxor.u32 %v523, 2147483648
        %v545 = vxor.u32 %v525, 2147483648
        %v546 = vxor.u32 %v528, 2147483648
        %v547 = vxor.u32 %v530, 2147483648
        %v548 = vmul.f32 %v532, 1.442695
        %v549 = vpow.pop %v548
        %v550 = vmul.f32 %v533, 1.442695
        %v551 = vpow.pop %v550
        %v552 = vmul.f32 %v534, 1.442695
        %v553 = vpow.pop %v552
        %v554 = vmul.f32 %v535, 1.442695
        %v555 = vpow.pop %v554
        %v556 = vmul.f32 %v536, 1.442695
        %v557 = vpow.pop %v556
        %v558 = vmul.f32 %v537, 1.442695
        %v559 = vpow.pop %v558
        %v560 = vmul.f32 %v538, 1.442695
        %v561 = vpow.pop %v560
        %v562 = vmul.f32 %v539, 1.442695
        %v563 = vpow.pop %v562
        %v564 = vmul.f32 %v540, 1.442695
        %v565 = vpow.pop %v564
        %v566 = vmul.f32 %v541, 1.442695
        %v567 = vpow.pop %v566
        %v568 = vmul.f32 %v542, 1.442695
        %v569 = vpow.pop %v568
        %v570 = vmul.f32 %v543, 1.442695
        %v571 = vpow.pop %v570
        %v572 = vmul.f32 %v544, 1.442695
        %v573 = vpow.pop %v572
        %v574 = vmul.f32 %v545, 1.442695
        %v575 = vpow.pop %v574
        %v576 = vmul.f32 %v546, 1.442695
        %v577 = vpow.pop %v576
        %v578 = vmul.f32 %v547, 1.442695
        %v579 = vpow.pop %v578
        %v580 = vadd.f32 %v549, 1.0
        %v581 = vadd.f32 %v551, 1.0
        %v582 = vadd.f32 %v553, 1.0
        %v583 = vadd.f32 %v555, 1.0
        %v584 = vadd.f32 %v557, 1.0
        %v585 = vadd.f32 %v559, 1.0
        %v586 = vadd.f32 %v561, 1.0
        %v587 = vadd.f32 %v563, 1.0
        %v588 = vadd.f32 %v565, 1.0
        %v589 = vadd.f32 %v567, 1.0
        %v590 = vadd.f32 %v569, 1.0
        %v591 = vadd.f32 %v571, 1.0
        %v592 = vadd.f32 %v573, 1.0
        %v593 = vadd.f32 %v575, 1.0
        %v594 = vadd.f32 %v577, 1.0
        %v595 = vadd.f32 %v579, 1.0
        %v596 = vrcp.pop %v580
        %v597 = vmul.f32 %v580, %v596
        %v598 = vsub.f32 1.0, %v597
        %v599 = vmul.f32 %v596, %v598
        %v600 = vadd.f32 %v596, %v599
        %vm601 = vweird.f32 %v580
        %vm602 = vweird.f32 %v596
        %vm603 = vmor %vm601, %vm602
        %v604 = vsel %vm603, %v596, %v600
        %v605 = vand.u32 2147483647, %v580
        %vm606 = vcmp.eq.f32.partialorder %v605, 8.507059e+37
        %v607 = vand.u32 %v580, 2147483648
        %v608 = vor.u32 1.1754944e-38, %v607
        %v609 = vsel %vm606, %v608, %v604
        %v610 = vmul.f32 1.0, %v609
        %v611 = vrcp.pop %v581
        %v612 = vmul.f32 %v581, %v611
        %v613 = vsub.f32 1.0, %v612
        %v614 = vmul.f32 %v611, %v613
        %v615 = vadd.f32 %v611, %v614
        %vm616 = vweird.f32 %v581
        %vm617 = vweird.f32 %v611
        %vm618 = vmor %vm616, %vm617
        %v619 = vsel %vm618, %v611, %v615
        %v620 = vand.u32 2147483647, %v581
        %vm621 = vcmp.eq.f32.partialorder %v620, 8.507059e+37
        %v622 = vand.u32 %v581, 2147483648
        %v623 = vor.u32 1.1754944e-38, %v622
        %v624 = vsel %vm621, %v623, %v619
        %v625 = vmul.f32 1.0, %v624
        %v626 = vrcp.pop %v582
        %v627 = vmul.f32 %v582, %v626
        %v628 = vsub.f32 1.0, %v627
        %v629 = vmul.f32 %v626, %v628
        %v630 = vadd.f32 %v626, %v629
        %vm631 = vweird.f32 %v582
        %vm632 = vweird.f32 %v626
        %vm633 = vmor %vm631, %vm632
        %v634 = vsel %vm633, %v626, %v630
        %v635 = vand.u32 2147483647, %v582
        %vm636 = vcmp.eq.f32.partialorder %v635, 8.507059e+37
        %v637 = vand.u32 %v582, 2147483648
        %v638 = vor.u32 1.1754944e-38, %v637
        %v639 = vsel %vm636, %v638, %v634
        %v640 = vmul.f32 1.0, %v639
        %v641 = vrcp.pop %v583
        %v642 = vmul.f32 %v583, %v641
        %v643 = vsub.f32 1.0, %v642
        %v644 = vmul.f32 %v641, %v643
        %v645 = vadd.f32 %v641, %v644
        %vm646 = vweird.f32 %v583
        %vm647 = vweird.f32 %v641
        %vm648 = vmor %vm646, %vm647
        %v649 = vsel %vm648, %v641, %v645
        %v650 = vand.u32 2147483647, %v583
        %vm651 = vcmp.eq.f32.partialorder %v650, 8.507059e+37
        %v652 = vand.u32 %v583, 2147483648
        %v653 = vor.u32 1.1754944e-38, %v652
        %v654 = vsel %vm651, %v653, %v649
        %v655 = vmul.f32 1.0, %v654
        %v656 = vrcp.pop %v584
        %v657 = vmul.f32 %v584, %v656
        %v658 = vsub.f32 1.0, %v657
        %v659 = vmul.f32 %v656, %v658
        %v660 = vadd.f32 %v656, %v659
        %vm661 = vweird.f32 %v584
        %vm662 = vweird.f32 %v656
        %vm663 = vmor %vm661, %vm662
        %v664 = vsel %vm663, %v656, %v660
        %v665 = vand.u32 2147483647, %v584
        %vm666 = vcmp.eq.f32.partialorder %v665, 8.507059e+37
        %v667 = vand.u32 %v584, 2147483648
        %v668 = vor.u32 1.1754944e-38, %v667
        %v669 = vsel %vm666, %v668, %v664
        %v670 = vmul.f32 1.0, %v669
        %v671 = vrcp.pop %v585
        %v672 = vmul.f32 %v585, %v671
        %v673 = vsub.f32 1.0, %v672
        %v674 = vmul.f32 %v671, %v673
        %v675 = vadd.f32 %v671, %v674
        %vm676 = vweird.f32 %v585
        %vm677 = vweird.f32 %v671
        %vm678 = vmor %vm676, %vm677
        %v679 = vsel %vm678, %v671, %v675
        %v680 = vand.u32 2147483647, %v585
        %vm681 = vcmp.eq.f32.partialorder %v680, 8.507059e+37
        %v682 = vand.u32 %v585, 2147483648
        %v683 = vor.u32 1.1754944e-38, %v682
        %v684 = vsel %vm681, %v683, %v679
        %v685 = vmul.f32 1.0, %v684
        %v686 = vrcp.pop %v586
        %v687 = vmul.f32 %v586, %v686
        %v688 = vsub.f32 1.0, %v687
        %v689 = vmul.f32 %v686, %v688
        %v690 = vadd.f32 %v686, %v689
        %vm691 = vweird.f32 %v586
        %vm692 = vweird.f32 %v686
        %vm693 = vmor %vm691, %vm692
        %v694 = vsel %vm693, %v686, %v690
        %v695 = vand.u32 2147483647, %v586
        %vm696 = vcmp.eq.f32.partialorder %v695, 8.507059e+37
        %v697 = vand.u32 %v586, 2147483648
        %v698 = vor.u32 1.1754944e-38, %v697
        %v699 = vsel %vm696, %v698, %v694
        %v700 = vmul.f32 1.0, %v699
        %v701 = vrcp.pop %v587
        %v702 = vmul.f32 %v587, %v701
        %v703 = vsub.f32 1.0, %v702
        %v704 = vmul.f32 %v701, %v703
        %v705 = vadd.f32 %v701, %v704
        %vm706 = vweird.f32 %v587
        %vm707 = vweird.f32 %v701
        %vm708 = vmor %vm706, %vm707
        %v709 = vsel %vm708, %v701, %v705
        %v710 = vand.u32 2147483647, %v587
        %vm711 = vcmp.eq.f32.partialorder %v710, 8.507059e+37
        %v712 = vand.u32 %v587, 2147483648
        %v713 = vor.u32 1.1754944e-38, %v712
        %v714 = vsel %vm711, %v713, %v709
        %v715 = vmul.f32 1.0, %v714
        %v716 = vrcp.pop %v588
        %v717 = vmul.f32 %v588, %v716
        %v718 = vsub.f32 1.0, %v717
        %v719 = vmul.f32 %v716, %v718
        %v720 = vadd.f32 %v716, %v719
        %vm721 = vweird.f32 %v588
        %vm722 = vweird.f32 %v716
        %vm723 = vmor %vm721, %vm722
        %v724 = vsel %vm723, %v716, %v720
        %v725 = vand.u32 2147483647, %v588
        %vm726 = vcmp.eq.f32.partialorder %v725, 8.507059e+37
        %v727 = vand.u32 %v588, 2147483648
        %v728 = vor.u32 1.1754944e-38, %v727
        %v729 = vsel %vm726, %v728, %v724
        %v730 = vmul.f32 1.0, %v729
        %v731 = vrcp.pop %v589
        %v732 = vmul.f32 %v589, %v731
        %v733 = vsub.f32 1.0, %v732
        %v734 = vmul.f32 %v731, %v733
        %v735 = vadd.f32 %v731, %v734
        %vm736 = vweird.f32 %v589
        %vm737 = vweird.f32 %v731
        %vm738 = vmor %vm736, %vm737
        %v739 = vsel %vm738, %v731, %v735
        %v740 = vand.u32 2147483647, %v589
        %vm741 = vcmp.eq.f32.partialorder %v740, 8.507059e+37
        %v742 = vand.u32 %v589, 2147483648
        %v743 = vor.u32 1.1754944e-38, %v742
        %v744 = vsel %vm741, %v743, %v739
        %v745 = vmul.f32 1.0, %v744
        %v746 = vrcp.pop %v590
        %v747 = vmul.f32 %v590, %v746
        %v748 = vsub.f32 1.0, %v747
        %v749 = vmul.f32 %v746, %v748
        %v750 = vadd.f32 %v746, %v749
        %vm751 = vweird.f32 %v590
        %vm752 = vweird.f32 %v746
        %vm753 = vmor %vm751, %vm752
        %v754 = vsel %vm753, %v746, %v750
        %v755 = vand.u32 2147483647, %v590
        %vm756 = vcmp.eq.f32.partialorder %v755, 8.507059e+37
        %v757 = vand.u32 %v590, 2147483648
        %v758 = vor.u32 1.1754944e-38, %v757
        %v759 = vsel %vm756, %v758, %v754
        %v760 = vmul.f32 1.0, %v759
        %v761 = vrcp.pop %v591
        %v762 = vmul.f32 %v591, %v761
        %v763 = vsub.f32 1.0, %v762
        %v764 = vmul.f32 %v761, %v763
        %v765 = vadd.f32 %v761, %v764
        %vm766 = vweird.f32 %v591
        %vm767 = vweird.f32 %v761
        %vm768 = vmor %vm766, %vm767
        %v769 = vsel %vm768, %v761, %v765
        %v770 = vand.u32 2147483647, %v591
        %vm771 = vcmp.eq.f32.partialorder %v770, 8.507059e+37
        %v772 = vand.u32 %v591, 2147483648
        %v773 = vor.u32 1.1754944e-38, %v772
        %v774 = vsel %vm771, %v773, %v769
        %v775 = vmul.f32 1.0, %v774
        %v776 = vrcp.pop %v592
        %v777 = vmul.f32 %v592, %v776
        %v778 = vsub.f32 1.0, %v777
        %v779 = vmul.f32 %v776, %v778
        %v780 = vadd.f32 %v776, %v779
        %vm781 = vweird.f32 %v592
        %vm782 = vweird.f32 %v776
        %vm783 = vmor %vm781, %vm782
        %v784 = vsel %vm783, %v776, %v780
        %v785 = vand.u32 2147483647, %v592
        %vm786 = vcmp.eq.f32.partialorder %v785, 8.507059e+37
        %v787 = vand.u32 %v592, 2147483648
        %v788 = vor.u32 1.1754944e-38, %v787
        %v789 = vsel %vm786, %v788, %v784
        %v790 = vmul.f32 1.0, %v789
        %v791 = vrcp.pop %v593
        %v792 = vmul.f32 %v593, %v791
        %v793 = vsub.f32 1.0, %v792
        %v794 = vmul.f32 %v791, %v793
        %v795 = vadd.f32 %v791, %v794
        %vm796 = vweird.f32 %v593
        %vm797 = vweird.f32 %v791
        %vm798 = vmor %vm796, %vm797
        %v799 = vsel %vm798, %v791, %v795
        %v800 = vand.u32 2147483647, %v593
        %vm801 = vcmp.eq.f32.partialorder %v800, 8.507059e+37
        %v802 = vand.u32 %v593, 2147483648
        %v803 = vor.u32 1.1754944e-38, %v802
        %v804 = vsel %vm801, %v803, %v799
        %v805 = vmul.f32 1.0, %v804
        %v806 = vrcp.pop %v594
        %v807 = vmul.f32 %v594, %v806
        %v808 = vsub.f32 1.0, %v807
        %v809 = vmul.f32 %v806, %v808
        %v810 = vadd.f32 %v806, %v809
        %vm811 = vweird.f32 %v594
        %vm812 = vweird.f32 %v806
        %vm813 = vmor %vm811, %vm812
        %v814 = vsel %vm813, %v806, %v810
        %v815 = vand.u32 2147483647, %v594
        %vm816 = vcmp.eq.f32.partialorder %v815, 8.507059e+37
        %v817 = vand.u32 %v594, 2147483648
        %v818 = vor.u32 1.1754944e-38, %v817
        %v819 = vsel %vm816, %v818, %v814
        %v820 = vmul.f32 1.0, %v819
        %v821 = vrcp.pop %v595
        %v822 = vmul.f32 %v595, %v821
        %v823 = vsub.f32 1.0, %v822
        %v824 = vmul.f32 %v821, %v823
        %v825 = vadd.f32 %v821, %v824
        %vm826 = vweird.f32 %v595
        %vm827 = vweird.f32 %v821
        %vm828 = vmor %vm826, %vm827
        %v829 = vsel %vm828, %v821, %v825
        %v830 = vand.u32 2147483647, %v595
        %vm831 = vcmp.eq.f32.partialorder %v830, 8.507059e+37
        %v832 = vand.u32 %v595, 2147483648
        %v833 = vor.u32 1.1754944e-38, %v832
        %v834 = vsel %vm831, %v833, %v829
        %v835 = vmul.f32 1.0, %v834
        %v836 = vmul.f32 %v493, %v610
        %v837 = vmul.f32 %v495, %v625
        %v838 = vmul.f32 %v498, %v640
        %v839 = vmul.f32 %v500, %v655
        %v840 = vmul.f32 %v503, %v670
        %v841 = vmul.f32 %v505, %v685
        %v842 = vmul.f32 %v508, %v700
        %v843 = vmul.f32 %v510, %v715
        %v844 = vmul.f32 %v513, %v730
        %v845 = vmul.f32 %v515, %v745
        %v846 = vmul.f32 %v518, %v760
        %v847 = vmul.f32 %v520, %v775
        %v848 = vmul.f32 %v523, %v790
        %v849 = vmul.f32 %v525, %v805
        %v850 = vmul.f32 %v528, %v820
        %v851 = vmul.f32 %v530, %v835
        %v852 = vpack.c.bf16 %v837, %v836
        %v853 = vpack.c.bf16 %v839, %v838
        %v854 = vpack.c.bf16 %v841, %v840
        %v855 = vpack.c.bf16 %v843, %v842
        %v856 = vpack.c.bf16 %v845, %v844
        %v857 = vpack.c.bf16 %v847, %v846
        %v858 = vpack.c.bf16 %v849, %v848
        %v859 = vpack.c.bf16 %v851, %v850
        %v860 = vld [vmem:[#allocation7] sm:$0xf]
        %v861 = vld [vmem:[#allocation7 + $0x4] sm:$0xf]
        %v862 = vld [vmem:[#allocation7 + $0x8] sm:$0xf]
        %v863 = vld [vmem:[#allocation7 + $0xc] sm:$0xf]
        %v864 = vld [vmem:[#allocation7 + $0x10] sm:$0xf]
        %v865 = vld [vmem:[#allocation7 + $0x14] sm:$0xf]
        %v866 = vld [vmem:[#allocation7 + $0x18] sm:$0xf]
        %v867 = vld [vmem:[#allocation7 + $0x1c] sm:$0xf]
        %v868 = vld [vmem:[#allocation7 + $0x20] sm:$0xf]
        %v869 = vld [vmem:[#allocation7 + $0x24] sm:$0xf]
        %v870 = vld [vmem:[#allocation7 + $0x28] sm:$0xf]
        %v871 = vld [vmem:[#allocation7 + $0x2c] sm:$0xf]
        %v872 = vld [vmem:[#allocation7 + $0x30] sm:$0xf]
        %v873 = vld [vmem:[#allocation7 + $0x34] sm:$0xf]
        %v874 = vld [vmem:[#allocation7 + $0x38] sm:$0xf]
        %v875 = vld [vmem:[#allocation7 + $0x3c] sm:$0xf]
        %v876 = vld [vmem:[%s4] sm:$0x1]
        %v878 = vperm.slane %v876, 0
        %v896 = vunpack.c.l.b16 %v860
        %v897 = vunpack.c.l.b16 %v861
        %v898 = vunpack.c.l.b16 %v862
        %v899 = vunpack.c.l.b16 %v863
        %v900 = vunpack.c.l.b16 %v864
        %v901 = vunpack.c.l.b16 %v865
        %v902 = vunpack.c.l.b16 %v866
        %v903 = vunpack.c.l.b16 %v867
        %v904 = vunpack.c.l.b16 %v868
        %v905 = vunpack.c.l.b16 %v869
        %v906 = vunpack.c.l.b16 %v870
        %v907 = vunpack.c.l.b16 %v871
        %v908 = vunpack.c.l.b16 %v872
        %v909 = vunpack.c.l.b16 %v873
        %v910 = vunpack.c.l.b16 %v874
        %v911 = vunpack.c.l.b16 %v875
        %v912 = vpack.c.b16 %v897, %v896
        %v913 = vpack.c.b16 %v899, %v898
        %v914 = vpack.c.b16 %v901, %v900
        %v915 = vpack.c.b16 %v903, %v902
        %v916 = vpack.c.b16 %v905, %v904
        %v917 = vpack.c.b16 %v907, %v906
        %v918 = vpack.c.b16 %v909, %v908
        %v919 = vpack.c.b16 %v911, %v910
        %928 = vmatpush.bf16.msra.mxu0 %v919
        %929 = vmatpush.bf16.msra.mxu0 %v918
        %930 = vmatpush.bf16.msra.mxu0 %v917
        %931 = vmatpush.bf16.msra.mxu0 %v916
        %932 = vmatpush.bf16.msra.mxu0 %v915
        %933 = vmatpush.bf16.msra.mxu0 %v914
        %934 = vmatpush.bf16.msra.mxu0 %v913
        %935 = vmatpush.bf16.msra.mxu0 %v912
        %936 = vmatmul.bf16.gmra.mxu0 %v852
        %v937 = vpop.f32.mrf.mxu0
        %v938 = vadd.f32 %v878, %v937
        %v939 = vpop.f32.mrf.mxu0
        %v940 = vadd.f32 %v878, %v939
        %941 = vmatmul.bf16.gmra.mxu0 %v853
        %v942 = vpop.f32.mrf.mxu0
        %v943 = vadd.f32 %v878, %v942
        %v944 = vpop.f32.mrf.mxu0
        %v945 = vadd.f32 %v878, %v944
        %946 = vmatmul.bf16.gmra.mxu0 %v854
        %v947 = vpop.f32.mrf.mxu0
        %v948 = vadd.f32 %v878, %v947
        %v949 = vpop.f32.mrf.mxu0
        %v950 = vadd.f32 %v878, %v949
        %951 = vmatmul.bf16.gmra.mxu0 %v855
        %v952 = vpop.f32.mrf.mxu0
        %v953 = vadd.f32 %v878, %v952
        %v954 = vpop.f32.mrf.mxu0
        %v955 = vadd.f32 %v878, %v954
        %956 = vmatmul.bf16.gmra.mxu0 %v856
        %v957 = vpop.f32.mrf.mxu0
        %v958 = vadd.f32 %v878, %v957
        %v959 = vpop.f32.mrf.mxu0
        %v960 = vadd.f32 %v878, %v959
        %961 = vmatmul.bf16.gmra.mxu0 %v857
        %v962 = vpop.f32.mrf.mxu0
        %v963 = vadd.f32 %v878, %v962
        %v964 = vpop.f32.mrf.mxu0
        %v965 = vadd.f32 %v878, %v964
        %966 = vmatmul.bf16.gmra.mxu0 %v858
        %v967 = vpop.f32.mrf.mxu0
        %v968 = vadd.f32 %v878, %v967
        %v969 = vpop.f32.mrf.mxu0
        %v970 = vadd.f32 %v878, %v969
        %971 = vmatmul.bf16.gmra.mxu0 %v859
        %v972 = vpop.f32.mrf.mxu0
        %v973 = vadd.f32 %v878, %v972
        %v974 = vpop.f32.mrf.mxu0
        %v975 = vadd.f32 %v878, %v974
        %976 = vdwg.mxu0
        %v977 = vxor.u32 %v938, 2147483648
        %v978 = vxor.u32 %v940, 2147483648
        %v979 = vxor.u32 %v943, 2147483648
        %v980 = vxor.u32 %v945, 2147483648
        %v981 = vxor.u32 %v948, 2147483648
        %v982 = vxor.u32 %v950, 2147483648
        %v983 = vxor.u32 %v953, 2147483648
        %v984 = vxor.u32 %v955, 2147483648
        %v985 = vxor.u32 %v958, 2147483648
        %v986 = vxor.u32 %v960, 2147483648
        %v987 = vxor.u32 %v963, 2147483648
        %v988 = vxor.u32 %v965, 2147483648
        %v989 = vxor.u32 %v968, 2147483648
        %v990 = vxor.u32 %v970, 2147483648
        %v991 = vxor.u32 %v973, 2147483648
        %v992 = vxor.u32 %v975, 2147483648
        %v993 = vmul.f32 %v977, 1.442695
        %v994 = vpow.pop %v993
        %v995 = vmul.f32 %v978, 1.442695
        %v996 = vpow.pop %v995
        %v997 = vmul.f32 %v979, 1.442695
        %v998 = vpow.pop %v997
        %v999 = vmul.f32 %v980, 1.442695
        %v1000 = vpow.pop %v999
        %v1001 = vmul.f32 %v981, 1.442695
        %v1002 = vpow.pop %v1001
        %v1003 = vmul.f32 %v982, 1.442695
        %v1004 = vpow.pop %v1003
        %v1005 = vmul.f32 %v983, 1.442695
        %v1006 = vpow.pop %v1005
        %v1007 = vmul.f32 %v984, 1.442695
        %v1008 = vpow.pop %v1007
        %v1009 = vmul.f32 %v985, 1.442695
        %v1010 = vpow.pop %v1009
        %v1011 = vmul.f32 %v986, 1.442695
        %v1012 = vpow.pop %v1011
        %v1013 = vmul.f32 %v987, 1.442695
        %v1014 = vpow.pop %v1013
        %v1015 = vmul.f32 %v988, 1.442695
        %v1016 = vpow.pop %v1015
        %v1017 = vmul.f32 %v989, 1.442695
        %v1018 = vpow.pop %v1017
        %v1019 = vmul.f32 %v990, 1.442695
        %v1020 = vpow.pop %v1019
        %v1021 = vmul.f32 %v991, 1.442695
        %v1022 = vpow.pop %v1021
        %v1023 = vmul.f32 %v992, 1.442695
        %v1024 = vpow.pop %v1023
        %v1025 = vadd.f32 %v994, 1.0
        %v1026 = vadd.f32 %v996, 1.0
        %v1027 = vadd.f32 %v998, 1.0
        %v1028 = vadd.f32 %v1000, 1.0
        %v1029 = vadd.f32 %v1002, 1.0
        %v1030 = vadd.f32 %v1004, 1.0
        %v1031 = vadd.f32 %v1006, 1.0
        %v1032 = vadd.f32 %v1008, 1.0
        %v1033 = vadd.f32 %v1010, 1.0
        %v1034 = vadd.f32 %v1012, 1.0
        %v1035 = vadd.f32 %v1014, 1.0
        %v1036 = vadd.f32 %v1016, 1.0
        %v1037 = vadd.f32 %v1018, 1.0
        %v1038 = vadd.f32 %v1020, 1.0
        %v1039 = vadd.f32 %v1022, 1.0
        %v1040 = vadd.f32 %v1024, 1.0
        %v1041 = vrcp.pop %v1025
        %v1042 = vmul.f32 %v1025, %v1041
        %v1043 = vsub.f32 1.0, %v1042
        %v1044 = vmul.f32 %v1041, %v1043
        %v1045 = vadd.f32 %v1041, %v1044
        %vm1046 = vweird.f32 %v1025
        %vm1047 = vweird.f32 %v1041
        %vm1048 = vmor %vm1046, %vm1047
        %v1049 = vsel %vm1048, %v1041, %v1045
        %v1050 = vand.u32 2147483647, %v1025
        %vm1051 = vcmp.eq.f32.partialorder %v1050, 8.507059e+37
        %v1052 = vand.u32 %v1025, 2147483648
        %v1053 = vor.u32 1.1754944e-38, %v1052
        %v1054 = vsel %vm1051, %v1053, %v1049
        %v1055 = vmul.f32 1.0, %v1054
        %v1056 = vrcp.pop %v1026
        %v1057 = vmul.f32 %v1026, %v1056
        %v1058 = vsub.f32 1.0, %v1057
        %v1059 = vmul.f32 %v1056, %v1058
        %v1060 = vadd.f32 %v1056, %v1059
        %vm1061 = vweird.f32 %v1026
        %vm1062 = vweird.f32 %v1056
        %vm1063 = vmor %vm1061, %vm1062
        %v1064 = vsel %vm1063, %v1056, %v1060
        %v1065 = vand.u32 2147483647, %v1026
        %vm1066 = vcmp.eq.f32.partialorder %v1065, 8.507059e+37
        %v1067 = vand.u32 %v1026, 2147483648
        %v1068 = vor.u32 1.1754944e-38, %v1067
        %v1069 = vsel %vm1066, %v1068, %v1064
        %v1070 = vmul.f32 1.0, %v1069
        %v1071 = vrcp.pop %v1027
        %v1072 = vmul.f32 %v1027, %v1071
        %v1073 = vsub.f32 1.0, %v1072
        %v1074 = vmul.f32 %v1071, %v1073
        %v1075 = vadd.f32 %v1071, %v1074
        %vm1076 = vweird.f32 %v1027
        %vm1077 = vweird.f32 %v1071
        %vm1078 = vmor %vm1076, %vm1077
        %v1079 = vsel %vm1078, %v1071, %v1075
        %v1080 = vand.u32 2147483647, %v1027
        %vm1081 = vcmp.eq.f32.partialorder %v1080, 8.507059e+37
        %v1082 = vand.u32 %v1027, 2147483648
        %v1083 = vor.u32 1.1754944e-38, %v1082
        %v1084 = vsel %vm1081, %v1083, %v1079
        %v1085 = vmul.f32 1.0, %v1084
        %v1086 = vrcp.pop %v1028
        %v1087 = vmul.f32 %v1028, %v1086
        %v1088 = vsub.f32 1.0, %v1087
        %v1089 = vmul.f32 %v1086, %v1088
        %v1090 = vadd.f32 %v1086, %v1089
        %vm1091 = vweird.f32 %v1028
        %vm1092 = vweird.f32 %v1086
        %vm1093 = vmor %vm1091, %vm1092
        %v1094 = vsel %vm1093, %v1086, %v1090
        %v1095 = vand.u32 2147483647, %v1028
        %vm1096 = vcmp.eq.f32.partialorder %v1095, 8.507059e+37
        %v1097 = vand.u32 %v1028, 2147483648
        %v1098 = vor.u32 1.1754944e-38, %v1097
        %v1099 = vsel %vm1096, %v1098, %v1094
        %v1100 = vmul.f32 1.0, %v1099
        %v1101 = vrcp.pop %v1029
        %v1102 = vmul.f32 %v1029, %v1101
        %v1103 = vsub.f32 1.0, %v1102
        %v1104 = vmul.f32 %v1101, %v1103
        %v1105 = vadd.f32 %v1101, %v1104
        %vm1106 = vweird.f32 %v1029
        %vm1107 = vweird.f32 %v1101
        %vm1108 = vmor %vm1106, %vm1107
        %v1109 = vsel %vm1108, %v1101, %v1105
        %v1110 = vand.u32 2147483647, %v1029
        %vm1111 = vcmp.eq.f32.partialorder %v1110, 8.507059e+37
        %v1112 = vand.u32 %v1029, 2147483648
        %v1113 = vor.u32 1.1754944e-38, %v1112
        %v1114 = vsel %vm1111, %v1113, %v1109
        %v1115 = vmul.f32 1.0, %v1114
        %v1116 = vrcp.pop %v1030
        %v1117 = vmul.f32 %v1030, %v1116
        %v1118 = vsub.f32 1.0, %v1117
        %v1119 = vmul.f32 %v1116, %v1118
        %v1120 = vadd.f32 %v1116, %v1119
        %vm1121 = vweird.f32 %v1030
        %vm1122 = vweird.f32 %v1116
        %vm1123 = vmor %vm1121, %vm1122
        %v1124 = vsel %vm1123, %v1116, %v1120
        %v1125 = vand.u32 2147483647, %v1030
        %vm1126 = vcmp.eq.f32.partialorder %v1125, 8.507059e+37
        %v1127 = vand.u32 %v1030, 2147483648
        %v1128 = vor.u32 1.1754944e-38, %v1127
        %v1129 = vsel %vm1126, %v1128, %v1124
        %v1130 = vmul.f32 1.0, %v1129
        %v1131 = vrcp.pop %v1031
        %v1132 = vmul.f32 %v1031, %v1131
        %v1133 = vsub.f32 1.0, %v1132
        %v1134 = vmul.f32 %v1131, %v1133
        %v1135 = vadd.f32 %v1131, %v1134
        %vm1136 = vweird.f32 %v1031
        %vm1137 = vweird.f32 %v1131
        %vm1138 = vmor %vm1136, %vm1137
        %v1139 = vsel %vm1138, %v1131, %v1135
        %v1140 = vand.u32 2147483647, %v1031
        %vm1141 = vcmp.eq.f32.partialorder %v1140, 8.507059e+37
        %v1142 = vand.u32 %v1031, 2147483648
        %v1143 = vor.u32 1.1754944e-38, %v1142
        %v1144 = vsel %vm1141, %v1143, %v1139
        %v1145 = vmul.f32 1.0, %v1144
        %v1146 = vrcp.pop %v1032
        %v1147 = vmul.f32 %v1032, %v1146
        %v1148 = vsub.f32 1.0, %v1147
        %v1149 = vmul.f32 %v1146, %v1148
        %v1150 = vadd.f32 %v1146, %v1149
        %vm1151 = vweird.f32 %v1032
        %vm1152 = vweird.f32 %v1146
        %vm1153 = vmor %vm1151, %vm1152
        %v1154 = vsel %vm1153, %v1146, %v1150
        %v1155 = vand.u32 2147483647, %v1032
        %vm1156 = vcmp.eq.f32.partialorder %v1155, 8.507059e+37
        %v1157 = vand.u32 %v1032, 2147483648
        %v1158 = vor.u32 1.1754944e-38, %v1157
        %v1159 = vsel %vm1156, %v1158, %v1154
        %v1160 = vmul.f32 1.0, %v1159
        %v1161 = vrcp.pop %v1033
        %v1162 = vmul.f32 %v1033, %v1161
        %v1163 = vsub.f32 1.0, %v1162
        %v1164 = vmul.f32 %v1161, %v1163
        %v1165 = vadd.f32 %v1161, %v1164
        %vm1166 = vweird.f32 %v1033
        %vm1167 = vweird.f32 %v1161
        %vm1168 = vmor %vm1166, %vm1167
        %v1169 = vsel %vm1168, %v1161, %v1165
        %v1170 = vand.u32 2147483647, %v1033
        %vm1171 = vcmp.eq.f32.partialorder %v1170, 8.507059e+37
        %v1172 = vand.u32 %v1033, 2147483648
        %v1173 = vor.u32 1.1754944e-38, %v1172
        %v1174 = vsel %vm1171, %v1173, %v1169
        %v1175 = vmul.f32 1.0, %v1174
        %v1176 = vrcp.pop %v1034
        %v1177 = vmul.f32 %v1034, %v1176
        %v1178 = vsub.f32 1.0, %v1177
        %v1179 = vmul.f32 %v1176, %v1178
        %v1180 = vadd.f32 %v1176, %v1179
        %vm1181 = vweird.f32 %v1034
        %vm1182 = vweird.f32 %v1176
        %vm1183 = vmor %vm1181, %vm1182
        %v1184 = vsel %vm1183, %v1176, %v1180
        %v1185 = vand.u32 2147483647, %v1034
        %vm1186 = vcmp.eq.f32.partialorder %v1185, 8.507059e+37
        %v1187 = vand.u32 %v1034, 2147483648
        %v1188 = vor.u32 1.1754944e-38, %v1187
        %v1189 = vsel %vm1186, %v1188, %v1184
        %v1190 = vmul.f32 1.0, %v1189
        %v1191 = vrcp.pop %v1035
        %v1192 = vmul.f32 %v1035, %v1191
        %v1193 = vsub.f32 1.0, %v1192
        %v1194 = vmul.f32 %v1191, %v1193
        %v1195 = vadd.f32 %v1191, %v1194
        %vm1196 = vweird.f32 %v1035
        %vm1197 = vweird.f32 %v1191
        %vm1198 = vmor %vm1196, %vm1197
        %v1199 = vsel %vm1198, %v1191, %v1195
        %v1200 = vand.u32 2147483647, %v1035
        %vm1201 = vcmp.eq.f32.partialorder %v1200, 8.507059e+37
        %v1202 = vand.u32 %v1035, 2147483648
        %v1203 = vor.u32 1.1754944e-38, %v1202
        %v1204 = vsel %vm1201, %v1203, %v1199
        %v1205 = vmul.f32 1.0, %v1204
        %v1206 = vrcp.pop %v1036
        %v1207 = vmul.f32 %v1036, %v1206
        %v1208 = vsub.f32 1.0, %v1207
        %v1209 = vmul.f32 %v1206, %v1208
        %v1210 = vadd.f32 %v1206, %v1209
        %vm1211 = vweird.f32 %v1036
        %vm1212 = vweird.f32 %v1206
        %vm1213 = vmor %vm1211, %vm1212
        %v1214 = vsel %vm1213, %v1206, %v1210
        %v1215 = vand.u32 2147483647, %v1036
        %vm1216 = vcmp.eq.f32.partialorder %v1215, 8.507059e+37
        %v1217 = vand.u32 %v1036, 2147483648
        %v1218 = vor.u32 1.1754944e-38, %v1217
        %v1219 = vsel %vm1216, %v1218, %v1214
        %v1220 = vmul.f32 1.0, %v1219
        %v1221 = vrcp.pop %v1037
        %v1222 = vmul.f32 %v1037, %v1221
        %v1223 = vsub.f32 1.0, %v1222
        %v1224 = vmul.f32 %v1221, %v1223
        %v1225 = vadd.f32 %v1221, %v1224
        %vm1226 = vweird.f32 %v1037
        %vm1227 = vweird.f32 %v1221
        %vm1228 = vmor %vm1226, %vm1227
        %v1229 = vsel %vm1228, %v1221, %v1225
        %v1230 = vand.u32 2147483647, %v1037
        %vm1231 = vcmp.eq.f32.partialorder %v1230, 8.507059e+37
        %v1232 = vand.u32 %v1037, 2147483648
        %v1233 = vor.u32 1.1754944e-38, %v1232
        %v1234 = vsel %vm1231, %v1233, %v1229
        %v1235 = vmul.f32 1.0, %v1234
        %v1236 = vrcp.pop %v1038
        %v1237 = vmul.f32 %v1038, %v1236
        %v1238 = vsub.f32 1.0, %v1237
        %v1239 = vmul.f32 %v1236, %v1238
        %v1240 = vadd.f32 %v1236, %v1239
        %vm1241 = vweird.f32 %v1038
        %vm1242 = vweird.f32 %v1236
        %vm1243 = vmor %vm1241, %vm1242
        %v1244 = vsel %vm1243, %v1236, %v1240
        %v1245 = vand.u32 2147483647, %v1038
        %vm1246 = vcmp.eq.f32.partialorder %v1245, 8.507059e+37
        %v1247 = vand.u32 %v1038, 2147483648
        %v1248 = vor.u32 1.1754944e-38, %v1247
        %v1249 = vsel %vm1246, %v1248, %v1244
        %v1250 = vmul.f32 1.0, %v1249
        %v1251 = vrcp.pop %v1039
        %v1252 = vmul.f32 %v1039, %v1251
        %v1253 = vsub.f32 1.0, %v1252
        %v1254 = vmul.f32 %v1251, %v1253
        %v1255 = vadd.f32 %v1251, %v1254
        %vm1256 = vweird.f32 %v1039
        %vm1257 = vweird.f32 %v1251
        %vm1258 = vmor %vm1256, %vm1257
        %v1259 = vsel %vm1258, %v1251, %v1255
        %v1260 = vand.u32 2147483647, %v1039
        %vm1261 = vcmp.eq.f32.partialorder %v1260, 8.507059e+37
        %v1262 = vand.u32 %v1039, 2147483648
        %v1263 = vor.u32 1.1754944e-38, %v1262
        %v1264 = vsel %vm1261, %v1263, %v1259
        %v1265 = vmul.f32 1.0, %v1264
        %v1266 = vrcp.pop %v1040
        %v1267 = vmul.f32 %v1040, %v1266
        %v1268 = vsub.f32 1.0, %v1267
        %v1269 = vmul.f32 %v1266, %v1268
        %v1270 = vadd.f32 %v1266, %v1269
        %vm1271 = vweird.f32 %v1040
        %vm1272 = vweird.f32 %v1266
        %vm1273 = vmor %vm1271, %vm1272
        %v1274 = vsel %vm1273, %v1266, %v1270
        %v1275 = vand.u32 2147483647, %v1040
        %vm1276 = vcmp.eq.f32.partialorder %v1275, 8.507059e+37
        %v1277 = vand.u32 %v1040, 2147483648
        %v1278 = vor.u32 1.1754944e-38, %v1277
        %v1279 = vsel %vm1276, %v1278, %v1274
        %v1280 = vmul.f32 1.0, %v1279
        %v1281 = vmul.f32 %v938, %v1055
        %v1282 = vmul.f32 %v940, %v1070
        %v1283 = vmul.f32 %v943, %v1085
        %v1284 = vmul.f32 %v945, %v1100
        %v1285 = vmul.f32 %v948, %v1115
        %v1286 = vmul.f32 %v950, %v1130
        %v1287 = vmul.f32 %v953, %v1145
        %v1288 = vmul.f32 %v955, %v1160
        %v1289 = vmul.f32 %v958, %v1175
        %v1290 = vmul.f32 %v960, %v1190
        %v1291 = vmul.f32 %v963, %v1205
        %v1292 = vmul.f32 %v965, %v1220
        %v1293 = vmul.f32 %v968, %v1235
        %v1294 = vmul.f32 %v970, %v1250
        %v1295 = vmul.f32 %v973, %v1265
        %v1296 = vmul.f32 %v975, %v1280
        %v1297 = vpack.c.bf16 %v1282, %v1281
        %v1298 = vpack.c.bf16 %v1284, %v1283
        %v1299 = vpack.c.bf16 %v1286, %v1285
        %v1300 = vpack.c.bf16 %v1288, %v1287
        %v1301 = vpack.c.bf16 %v1290, %v1289
        %v1302 = vpack.c.bf16 %v1292, %v1291
        %v1303 = vpack.c.bf16 %v1294, %v1293
        %v1304 = vpack.c.bf16 %v1296, %v1295
        %v1305 = vld [vmem:[#allocation8] sm:$0xf]
        %v1306 = vld [vmem:[#allocation8 + $0x4] sm:$0xf]
        %v1307 = vld [vmem:[#allocation8 + $0x8] sm:$0xf]
        %v1308 = vld [vmem:[#allocation8 + $0xc] sm:$0xf]
        %v1309 = vld [vmem:[#allocation8 + $0x10] sm:$0xf]
        %v1310 = vld [vmem:[#allocation8 + $0x14] sm:$0xf]
        %v1311 = vld [vmem:[#allocation8 + $0x18] sm:$0xf]
        %v1312 = vld [vmem:[#allocation8 + $0x1c] sm:$0xf]
        %v1313 = vld [vmem:[#allocation8 + $0x20] sm:$0xf]
        %v1314 = vld [vmem:[#allocation8 + $0x24] sm:$0xf]
        %v1315 = vld [vmem:[#allocation8 + $0x28] sm:$0xf]
        %v1316 = vld [vmem:[#allocation8 + $0x2c] sm:$0xf]
        %v1317 = vld [vmem:[#allocation8 + $0x30] sm:$0xf]
        %v1318 = vld [vmem:[#allocation8 + $0x34] sm:$0xf]
        %v1319 = vld [vmem:[#allocation8 + $0x38] sm:$0xf]
        %v1320 = vld [vmem:[#allocation8 + $0x3c] sm:$0xf]
        %v1321 = vld [vmem:[%s6] sm:$0x1]
        %v1323 = vperm.slane %v1321, 0
        %v1341 = vunpack.c.l.b16 %v1305
        %v1342 = vunpack.c.l.b16 %v1306
        %v1343 = vunpack.c.l.b16 %v1307
        %v1344 = vunpack.c.l.b16 %v1308
        %v1345 = vunpack.c.l.b16 %v1309
        %v1346 = vunpack.c.l.b16 %v1310
        %v1347 = vunpack.c.l.b16 %v1311
        %v1348 = vunpack.c.l.b16 %v1312
        %v1349 = vunpack.c.l.b16 %v1313
        %v1350 = vunpack.c.l.b16 %v1314
        %v1351 = vunpack.c.l.b16 %v1315
        %v1352 = vunpack.c.l.b16 %v1316
        %v1353 = vunpack.c.l.b16 %v1317
        %v1354 = vunpack.c.l.b16 %v1318
        %v1355 = vunpack.c.l.b16 %v1319
        %v1356 = vunpack.c.l.b16 %v1320
        %v1357 = vpack.c.b16 %v1342, %v1341
        %v1358 = vpack.c.b16 %v1344, %v1343
        %v1359 = vpack.c.b16 %v1346, %v1345
        %v1360 = vpack.c.b16 %v1348, %v1347
        %v1361 = vpack.c.b16 %v1350, %v1349
        %v1362 = vpack.c.b16 %v1352, %v1351
        %v1363 = vpack.c.b16 %v1354, %v1353
        %v1364 = vpack.c.b16 %v1356, %v1355
        %1373 = vmatpush.bf16.msra.mxu0 %v1364
        %1374 = vmatpush.bf16.msra.mxu0 %v1363
        %1375 = vmatpush.bf16.msra.mxu0 %v1362
        %1376 = vmatpush.bf16.msra.mxu0 %v1361
        %1377 = vmatpush.bf16.msra.mxu0 %v1360
        %1378 = vmatpush.bf16.msra.mxu0 %v1359
        %1379 = vmatpush.bf16.msra.mxu0 %v1358
        %1380 = vmatpush.bf16.msra.mxu0 %v1357
        %1381 = vmatmul.bf16.gmra.mxu0 %v1297
        %v1382 = vpop.f32.mrf.mxu0
        %v1383 = vadd.f32 %v1323, %v1382
        %v1384 = vpop.f32.mrf.mxu0
        %v1385 = vadd.f32 %v1323, %v1384
        %1386 = vmatmul.bf16.gmra.mxu0 %v1298
        %v1387 = vpop.f32.mrf.mxu0
        %v1388 = vadd.f32 %v1323, %v1387
        %v1389 = vpop.f32.mrf.mxu0
        %v1390 = vadd.f32 %v1323, %v1389
        %1391 = vmatmul.bf16.gmra.mxu0 %v1299
        %v1392 = vpop.f32.mrf.mxu0
        %v1393 = vadd.f32 %v1323, %v1392
        %v1394 = vpop.f32.mrf.mxu0
        %v1395 = vadd.f32 %v1323, %v1394
        %1396 = vmatmul.bf16.gmra.mxu0 %v1300
        %v1397 = vpop.f32.mrf.mxu0
        %v1398 = vadd.f32 %v1323, %v1397
        %v1399 = vpop.f32.mrf.mxu0
        %v1400 = vadd.f32 %v1323, %v1399
        %1401 = vmatmul.bf16.gmra.mxu0 %v1301
        %v1402 = vpop.f32.mrf.mxu0
        %v1403 = vadd.f32 %v1323, %v1402
        %v1404 = vpop.f32.mrf.mxu0
        %v1405 = vadd.f32 %v1323, %v1404
        %1406 = vmatmul.bf16.gmra.mxu0 %v1302
        %v1407 = vpop.f32.mrf.mxu0
        %v1408 = vadd.f32 %v1323, %v1407
        %v1409 = vpop.f32.mrf.mxu0
        %v1410 = vadd.f32 %v1323, %v1409
        %1411 = vmatmul.bf16.gmra.mxu0 %v1303
        %v1412 = vpop.f32.mrf.mxu0
        %v1413 = vadd.f32 %v1323, %v1412
        %v1414 = vpop.f32.mrf.mxu0
        %v1415 = vadd.f32 %v1323, %v1414
        %1416 = vmatmul.bf16.gmra.mxu0 %v1304
        %v1417 = vpop.f32.mrf.mxu0
        %v1418 = vadd.f32 %v1323, %v1417
        %v1419 = vpop.f32.mrf.mxu0
        %v1420 = vadd.f32 %v1323, %v1419
        %1421 = vdwg.mxu0
        %v1422 = vxor.u32 %v1383, 2147483648
        %v1423 = vxor.u32 %v1385, 2147483648
        %v1424 = vxor.u32 %v1388, 2147483648
        %v1425 = vxor.u32 %v1390, 2147483648
        %v1426 = vxor.u32 %v1393, 2147483648
        %v1427 = vxor.u32 %v1395, 2147483648
        %v1428 = vxor.u32 %v1398, 2147483648
        %v1429 = vxor.u32 %v1400, 2147483648
        %v1430 = vxor.u32 %v1403, 2147483648
        %v1431 = vxor.u32 %v1405, 2147483648
        %v1432 = vxor.u32 %v1408, 2147483648
        %v1433 = vxor.u32 %v1410, 2147483648
        %v1434 = vxor.u32 %v1413, 2147483648
        %v1435 = vxor.u32 %v1415, 2147483648
        %v1436 = vxor.u32 %v1418, 2147483648
        %v1437 = vxor.u32 %v1420, 2147483648
        %v1438 = vmul.f32 %v1422, 1.442695
        %v1439 = vpow.pop %v1438
        %v1440 = vmul.f32 %v1423, 1.442695
        %v1441 = vpow.pop %v1440
        %v1442 = vmul.f32 %v1424, 1.442695
        %v1443 = vpow.pop %v1442
        %v1444 = vmul.f32 %v1425, 1.442695
        %v1445 = vpow.pop %v1444
        %v1446 = vmul.f32 %v1426, 1.442695
        %v1447 = vpow.pop %v1446
        %v1448 = vmul.f32 %v1427, 1.442695
        %v1449 = vpow.pop %v1448
        %v1450 = vmul.f32 %v1428, 1.442695
        %v1451 = vpow.pop %v1450
        %v1452 = vmul.f32 %v1429, 1.442695
        %v1453 = vpow.pop %v1452
        %v1454 = vmul.f32 %v1430, 1.442695
        %v1455 = vpow.pop %v1454
        %v1456 = vmul.f32 %v1431, 1.442695
        %v1457 = vpow.pop %v1456
        %v1458 = vmul.f32 %v1432, 1.442695
        %v1459 = vpow.pop %v1458
        %v1460 = vmul.f32 %v1433, 1.442695
        %v1461 = vpow.pop %v1460
        %v1462 = vmul.f32 %v1434, 1.442695
        %v1463 = vpow.pop %v1462
        %v1464 = vmul.f32 %v1435, 1.442695
        %v1465 = vpow.pop %v1464
        %v1466 = vmul.f32 %v1436, 1.442695
        %v1467 = vpow.pop %v1466
        %v1468 = vmul.f32 %v1437, 1.442695
        %v1469 = vpow.pop %v1468
        %v1470 = vadd.f32 %v1439, 1.0
        %v1471 = vadd.f32 %v1441, 1.0
        %v1472 = vadd.f32 %v1443, 1.0
        %v1473 = vadd.f32 %v1445, 1.0
        %v1474 = vadd.f32 %v1447, 1.0
        %v1475 = vadd.f32 %v1449, 1.0
        %v1476 = vadd.f32 %v1451, 1.0
        %v1477 = vadd.f32 %v1453, 1.0
        %v1478 = vadd.f32 %v1455, 1.0
        %v1479 = vadd.f32 %v1457, 1.0
        %v1480 = vadd.f32 %v1459, 1.0
        %v1481 = vadd.f32 %v1461, 1.0
        %v1482 = vadd.f32 %v1463, 1.0
        %v1483 = vadd.f32 %v1465, 1.0
        %v1484 = vadd.f32 %v1467, 1.0
        %v1485 = vadd.f32 %v1469, 1.0
        %v1486 = vrcp.pop %v1470
        %v1487 = vmul.f32 %v1470, %v1486
        %v1488 = vsub.f32 1.0, %v1487
        %v1489 = vmul.f32 %v1486, %v1488
        %v1490 = vadd.f32 %v1486, %v1489
        %vm1491 = vweird.f32 %v1470
        %vm1492 = vweird.f32 %v1486
        %vm1493 = vmor %vm1491, %vm1492
        %v1494 = vsel %vm1493, %v1486, %v1490
        %v1495 = vand.u32 2147483647, %v1470
        %vm1496 = vcmp.eq.f32.partialorder %v1495, 8.507059e+37
        %v1497 = vand.u32 %v1470, 2147483648
        %v1498 = vor.u32 1.1754944e-38, %v1497
        %v1499 = vsel %vm1496, %v1498, %v1494
        %v1500 = vmul.f32 1.0, %v1499
        %v1501 = vrcp.pop %v1471
        %v1502 = vmul.f32 %v1471, %v1501
        %v1503 = vsub.f32 1.0, %v1502
        %v1504 = vmul.f32 %v1501, %v1503
        %v1505 = vadd.f32 %v1501, %v1504
        %vm1506 = vweird.f32 %v1471
        %vm1507 = vweird.f32 %v1501
        %vm1508 = vmor %vm1506, %vm1507
        %v1509 = vsel %vm1508, %v1501, %v1505
        %v1510 = vand.u32 2147483647, %v1471
        %vm1511 = vcmp.eq.f32.partialorder %v1510, 8.507059e+37
        %v1512 = vand.u32 %v1471, 2147483648
        %v1513 = vor.u32 1.1754944e-38, %v1512
        %v1514 = vsel %vm1511, %v1513, %v1509
        %v1515 = vmul.f32 1.0, %v1514
        %v1516 = vrcp.pop %v1472
        %v1517 = vmul.f32 %v1472, %v1516
        %v1518 = vsub.f32 1.0, %v1517
        %v1519 = vmul.f32 %v1516, %v1518
        %v1520 = vadd.f32 %v1516, %v1519
        %vm1521 = vweird.f32 %v1472
        %vm1522 = vweird.f32 %v1516
        %vm1523 = vmor %vm1521, %vm1522
        %v1524 = vsel %vm1523, %v1516, %v1520
        %v1525 = vand.u32 2147483647, %v1472
        %vm1526 = vcmp.eq.f32.partialorder %v1525, 8.507059e+37
        %v1527 = vand.u32 %v1472, 2147483648
        %v1528 = vor.u32 1.1754944e-38, %v1527
        %v1529 = vsel %vm1526, %v1528, %v1524
        %v1530 = vmul.f32 1.0, %v1529
        %v1531 = vrcp.pop %v1473
        %v1532 = vmul.f32 %v1473, %v1531
        %v1533 = vsub.f32 1.0, %v1532
        %v1534 = vmul.f32 %v1531, %v1533
        %v1535 = vadd.f32 %v1531, %v1534
        %vm1536 = vweird.f32 %v1473
        %vm1537 = vweird.f32 %v1531
        %vm1538 = vmor %vm1536, %vm1537
        %v1539 = vsel %vm1538, %v1531, %v1535
        %v1540 = vand.u32 2147483647, %v1473
        %vm1541 = vcmp.eq.f32.partialorder %v1540, 8.507059e+37
        %v1542 = vand.u32 %v1473, 2147483648
        %v1543 = vor.u32 1.1754944e-38, %v1542
        %v1544 = vsel %vm1541, %v1543, %v1539
        %v1545 = vmul.f32 1.0, %v1544
        %v1546 = vrcp.pop %v1474
        %v1547 = vmul.f32 %v1474, %v1546
        %v1548 = vsub.f32 1.0, %v1547
        %v1549 = vmul.f32 %v1546, %v1548
        %v1550 = vadd.f32 %v1546, %v1549
        %vm1551 = vweird.f32 %v1474
        %vm1552 = vweird.f32 %v1546
        %vm1553 = vmor %vm1551, %vm1552
        %v1554 = vsel %vm1553, %v1546, %v1550
        %v1555 = vand.u32 2147483647, %v1474
        %vm1556 = vcmp.eq.f32.partialorder %v1555, 8.507059e+37
        %v1557 = vand.u32 %v1474, 2147483648
        %v1558 = vor.u32 1.1754944e-38, %v1557
        %v1559 = vsel %vm1556, %v1558, %v1554
        %v1560 = vmul.f32 1.0, %v1559
        %v1561 = vrcp.pop %v1475
        %v1562 = vmul.f32 %v1475, %v1561
        %v1563 = vsub.f32 1.0, %v1562
        %v1564 = vmul.f32 %v1561, %v1563
        %v1565 = vadd.f32 %v1561, %v1564
        %vm1566 = vweird.f32 %v1475
        %vm1567 = vweird.f32 %v1561
        %vm1568 = vmor %vm1566, %vm1567
        %v1569 = vsel %vm1568, %v1561, %v1565
        %v1570 = vand.u32 2147483647, %v1475
        %vm1571 = vcmp.eq.f32.partialorder %v1570, 8.507059e+37
        %v1572 = vand.u32 %v1475, 2147483648
        %v1573 = vor.u32 1.1754944e-38, %v1572
        %v1574 = vsel %vm1571, %v1573, %v1569
        %v1575 = vmul.f32 1.0, %v1574
        %v1576 = vrcp.pop %v1476
        %v1577 = vmul.f32 %v1476, %v1576
        %v1578 = vsub.f32 1.0, %v1577
        %v1579 = vmul.f32 %v1576, %v1578
        %v1580 = vadd.f32 %v1576, %v1579
        %vm1581 = vweird.f32 %v1476
        %vm1582 = vweird.f32 %v1576
        %vm1583 = vmor %vm1581, %vm1582
        %v1584 = vsel %vm1583, %v1576, %v1580
        %v1585 = vand.u32 2147483647, %v1476
        %vm1586 = vcmp.eq.f32.partialorder %v1585, 8.507059e+37
        %v1587 = vand.u32 %v1476, 2147483648
        %v1588 = vor.u32 1.1754944e-38, %v1587
        %v1589 = vsel %vm1586, %v1588, %v1584
        %v1590 = vmul.f32 1.0, %v1589
        %v1591 = vrcp.pop %v1477
        %v1592 = vmul.f32 %v1477, %v1591
        %v1593 = vsub.f32 1.0, %v1592
        %v1594 = vmul.f32 %v1591, %v1593
        %v1595 = vadd.f32 %v1591, %v1594
        %vm1596 = vweird.f32 %v1477
        %vm1597 = vweird.f32 %v1591
        %vm1598 = vmor %vm1596, %vm1597
        %v1599 = vsel %vm1598, %v1591, %v1595
        %v1600 = vand.u32 2147483647, %v1477
        %vm1601 = vcmp.eq.f32.partialorder %v1600, 8.507059e+37
        %v1602 = vand.u32 %v1477, 2147483648
        %v1603 = vor.u32 1.1754944e-38, %v1602
        %v1604 = vsel %vm1601, %v1603, %v1599
        %v1605 = vmul.f32 1.0, %v1604
        %v1606 = vrcp.pop %v1478
        %v1607 = vmul.f32 %v1478, %v1606
        %v1608 = vsub.f32 1.0, %v1607
        %v1609 = vmul.f32 %v1606, %v1608
        %v1610 = vadd.f32 %v1606, %v1609
        %vm1611 = vweird.f32 %v1478
        %vm1612 = vweird.f32 %v1606
        %vm1613 = vmor %vm1611, %vm1612
        %v1614 = vsel %vm1613, %v1606, %v1610
        %v1615 = vand.u32 2147483647, %v1478
        %vm1616 = vcmp.eq.f32.partialorder %v1615, 8.507059e+37
        %v1617 = vand.u32 %v1478, 2147483648
        %v1618 = vor.u32 1.1754944e-38, %v1617
        %v1619 = vsel %vm1616, %v1618, %v1614
        %v1620 = vmul.f32 1.0, %v1619
        %v1621 = vrcp.pop %v1479
        %v1622 = vmul.f32 %v1479, %v1621
        %v1623 = vsub.f32 1.0, %v1622
        %v1624 = vmul.f32 %v1621, %v1623
        %v1625 = vadd.f32 %v1621, %v1624
        %vm1626 = vweird.f32 %v1479
        %vm1627 = vweird.f32 %v1621
        %vm1628 = vmor %vm1626, %vm1627
        %v1629 = vsel %vm1628, %v1621, %v1625
        %v1630 = vand.u32 2147483647, %v1479
        %vm1631 = vcmp.eq.f32.partialorder %v1630, 8.507059e+37
        %v1632 = vand.u32 %v1479, 2147483648
        %v1633 = vor.u32 1.1754944e-38, %v1632
        %v1634 = vsel %vm1631, %v1633, %v1629
        %v1635 = vmul.f32 1.0, %v1634
        %v1636 = vrcp.pop %v1480
        %v1637 = vmul.f32 %v1480, %v1636
        %v1638 = vsub.f32 1.0, %v1637
        %v1639 = vmul.f32 %v1636, %v1638
        %v1640 = vadd.f32 %v1636, %v1639
        %vm1641 = vweird.f32 %v1480
        %vm1642 = vweird.f32 %v1636
        %vm1643 = vmor %vm1641, %vm1642
        %v1644 = vsel %vm1643, %v1636, %v1640
        %v1645 = vand.u32 2147483647, %v1480
        %vm1646 = vcmp.eq.f32.partialorder %v1645, 8.507059e+37
        %v1647 = vand.u32 %v1480, 2147483648
        %v1648 = vor.u32 1.1754944e-38, %v1647
        %v1649 = vsel %vm1646, %v1648, %v1644
        %v1650 = vmul.f32 1.0, %v1649
        %v1651 = vrcp.pop %v1481
        %v1652 = vmul.f32 %v1481, %v1651
        %v1653 = vsub.f32 1.0, %v1652
        %v1654 = vmul.f32 %v1651, %v1653
        %v1655 = vadd.f32 %v1651, %v1654
        %vm1656 = vweird.f32 %v1481
        %vm1657 = vweird.f32 %v1651
        %vm1658 = vmor %vm1656, %vm1657
        %v1659 = vsel %vm1658, %v1651, %v1655
        %v1660 = vand.u32 2147483647, %v1481
        %vm1661 = vcmp.eq.f32.partialorder %v1660, 8.507059e+37
        %v1662 = vand.u32 %v1481, 2147483648
        %v1663 = vor.u32 1.1754944e-38, %v1662
        %v1664 = vsel %vm1661, %v1663, %v1659
        %v1665 = vmul.f32 1.0, %v1664
        %v1666 = vrcp.pop %v1482
        %v1667 = vmul.f32 %v1482, %v1666
        %v1668 = vsub.f32 1.0, %v1667
        %v1669 = vmul.f32 %v1666, %v1668
        %v1670 = vadd.f32 %v1666, %v1669
        %vm1671 = vweird.f32 %v1482
        %vm1672 = vweird.f32 %v1666
        %vm1673 = vmor %vm1671, %vm1672
        %v1674 = vsel %vm1673, %v1666, %v1670
        %v1675 = vand.u32 2147483647, %v1482
        %vm1676 = vcmp.eq.f32.partialorder %v1675, 8.507059e+37
        %v1677 = vand.u32 %v1482, 2147483648
        %v1678 = vor.u32 1.1754944e-38, %v1677
        %v1679 = vsel %vm1676, %v1678, %v1674
        %v1680 = vmul.f32 1.0, %v1679
        %v1681 = vrcp.pop %v1483
        %v1682 = vmul.f32 %v1483, %v1681
        %v1683 = vsub.f32 1.0, %v1682
        %v1684 = vmul.f32 %v1681, %v1683
        %v1685 = vadd.f32 %v1681, %v1684
        %vm1686 = vweird.f32 %v1483
        %vm1687 = vweird.f32 %v1681
        %vm1688 = vmor %vm1686, %vm1687
        %v1689 = vsel %vm1688, %v1681, %v1685
        %v1690 = vand.u32 2147483647, %v1483
        %vm1691 = vcmp.eq.f32.partialorder %v1690, 8.507059e+37
        %v1692 = vand.u32 %v1483, 2147483648
        %v1693 = vor.u32 1.1754944e-38, %v1692
        %v1694 = vsel %vm1691, %v1693, %v1689
        %v1695 = vmul.f32 1.0, %v1694
        %v1696 = vrcp.pop %v1484
        %v1697 = vmul.f32 %v1484, %v1696
        %v1698 = vsub.f32 1.0, %v1697
        %v1699 = vmul.f32 %v1696, %v1698
        %v1700 = vadd.f32 %v1696, %v1699
        %vm1701 = vweird.f32 %v1484
        %vm1702 = vweird.f32 %v1696
        %vm1703 = vmor %vm1701, %vm1702
        %v1704 = vsel %vm1703, %v1696, %v1700
        %v1705 = vand.u32 2147483647, %v1484
        %vm1706 = vcmp.eq.f32.partialorder %v1705, 8.507059e+37
        %v1707 = vand.u32 %v1484, 2147483648
        %v1708 = vor.u32 1.1754944e-38, %v1707
        %v1709 = vsel %vm1706, %v1708, %v1704
        %v1710 = vmul.f32 1.0, %v1709
        %v1711 = vrcp.pop %v1485
        %v1712 = vmul.f32 %v1485, %v1711
        %v1713 = vsub.f32 1.0, %v1712
        %v1714 = vmul.f32 %v1711, %v1713
        %v1715 = vadd.f32 %v1711, %v1714
        %vm1716 = vweird.f32 %v1485
        %vm1717 = vweird.f32 %v1711
        %vm1718 = vmor %vm1716, %vm1717
        %v1719 = vsel %vm1718, %v1711, %v1715
        %v1720 = vand.u32 2147483647, %v1485
        %vm1721 = vcmp.eq.f32.partialorder %v1720, 8.507059e+37
        %v1722 = vand.u32 %v1485, 2147483648
        %v1723 = vor.u32 1.1754944e-38, %v1722
        %v1724 = vsel %vm1721, %v1723, %v1719
        %v1725 = vmul.f32 1.0, %v1724
        %1726 = vst [vmem:[%s348] sm:$0xff] %v1500
        %1727 = vst [vmem:[%s348 + $0x8] sm:$0xff] %v1515
        %1728 = vst [vmem:[%s348 + $0x10] sm:$0xff] %v1530
        %1729 = vst [vmem:[%s348 + $0x18] sm:$0xff] %v1545
        %1730 = vst [vmem:[%s348 + $0x20] sm:$0xff] %v1560
        %1731 = vst [vmem:[%s348 + $0x28] sm:$0xff] %v1575
        %1732 = vst [vmem:[%s348 + $0x30] sm:$0xff] %v1590
        %1733 = vst [vmem:[%s348 + $0x38] sm:$0xff] %v1605
        %1734 = vst [vmem:[%s348 + $0x40] sm:$0xff] %v1620
        %1735 = vst [vmem:[%s348 + $0x48] sm:$0xff] %v1635
        %1736 = vst [vmem:[%s348 + $0x50] sm:$0xff] %v1650
        %1737 = vst [vmem:[%s348 + $0x58] sm:$0xff] %v1665
        %1738 = vst [vmem:[%s348 + $0x60] sm:$0xff] %v1680
        %1739 = vst [vmem:[%s348 + $0x68] sm:$0xff] %v1695
        %1740 = vst [vmem:[%s348 + $0x70] sm:$0xff] %v1710
        %1741 = vst [vmem:[%s348 + $0x78] sm:$0xff] %v1725
        %s1742 = sand.u32 %s186, 1
        %s1743 = scalar_lea.sflag [#allocation4], %s1742
        %s1744 = sand.u32 %s186, 1
        %s1745 = smul.addr %s1744, 128
        %s1746 = scalar_lea.vmem [#allocation10], %s1745
        // Predicated region
        $region65: #{tpu_custom_call.1} parent=47 // pred_check
          %p1747 = pneg %p196
        $region66: #{tpu_custom_call.1} parent=47 // pred_check_branch
          %1749 = sbr.rel (%p1747) target = $region68
        $region67: #{tpu_custom_call.1} parent=47 // pred_region
          %s1750 = smul.u32 16, %s26
          %1752 = vsyncadd %s1743, 0
          %s1753 = smul.addr %s1750, 8
          %s1754 = scalar_lea.hbm %s7, %s1753
          %s1755 = sshll.u32 %s1746, 4
          %s1756 = int_to_ptr.vmem [resolvable:$true] %s1755
          %s1757 = sshll.u32 %s1754, 4
          %s1758 = int_to_ptr.hbm [resolvable:$true] %s1757
          %1763 = dma.vmem_to_hbm [thread:$0]  %s1756, 2048, %s1758, %s1743, 128, 128, 8
        $region68: #{tpu_custom_call.1} parent=47 // pred_fallthru
          _
      $region48: #{tpu_custom_call.1} parent=5 // pred_fallthru
        _
      %p1764 = scmp.le.s32.totalorder 2, %s21
      // Predicated region
      $region69: #{tpu_custom_call.1} parent=5 // pred_check
        %p1765 = pneg %p1764
      $region70: #{tpu_custom_call.1} parent=5 // pred_check_branch
        %1767 = sbr.rel (%p1765) target = $region72
      $region71: #{tpu_custom_call.1} parent=5 // pred_region
        %s1768 = ssub.s32 %s21, 2
        // Predicated region
        $region73: #{tpu_custom_call.1} parent=71 // pred_check
          %p1769 = pneg %p202
        $region74: #{tpu_custom_call.1} parent=71 // pred_check_branch
          %1771 = sbr.rel (%p1769) target = $region76
        $region75: #{tpu_custom_call.1} parent=71 // pred_region
          %s1772 = sand.u32 %s187, 1
          %s1773 = scalar_lea.sflag [#allocation4], %s1772
          %s1774 = sand.u32 %s187, 1
          %s1775 = smul.addr %s1774, 128
          %s1776 = scalar_lea.vmem [#allocation10], %s1775
          %1778 = dma.done %s1773, 2048
        $region76: #{tpu_custom_call.1} parent=71 // pred_fallthru
          _
      $region72: #{tpu_custom_call.1} parent=5 // pred_fallthru
        _
    $region6: #{tpu_custom_call.1} parent=1 // loop_footer
      %s25 = sadd.s32 1, %s21
    $region7: #{tpu_custom_call.1} parent=1 // loop_footer_branch
      %20 = sbr.rel target = $region3
    $region8: #{tpu_custom_call.1} parent=1 // loop_exit
      _
    %1779 = vsyncpa [#allocation3], 1
    %s1780 = scalar_lea.sflag [#allocation3], 1
    %1781 = vsyncpa %s1780, 1
    %1782 = vsyncpa [#allocation6], 1
    %1783 = vsyncpa [#allocation9], 1
    %1784 = vsyncpa [#allocation4], 1
    %s1785 = scalar_lea.sflag [#allocation4], 1
    %1786 = vsyncpa %s1785, 1

</llo_original>
